<compile_context>
chip_gen: v7x
topology: tpu7x:2x2x1
jax: 0.10.0
libtpu: 0.0.40
codegen_flags: <defaults>
</compile_context>

<pallas_src>
import functools

import jax
import jax.numpy as jnp
from jax.experimental import pallas as pl
from jax.experimental.pallas import tpu as pltpu


def _ceil_to(x, m):
    return ((x + m - 1) // m) * m


def _pick_tm(m, tm_max):
    """Row-tile size: multiple of 16, <= tm_max, and >=2 grid steps when the
    problem is big enough to split (keeps both v7x TensorCores busy)."""
    tm = min(tm_max, _ceil_to(max(m, 16), 16))
    if m > 16:
        tm = min(tm, _ceil_to(-(-m // 2), 16))
    return tm


def _vmem_limit_bytes(*blocks):
    """blocks: (shape, dtype, n_buffers).  Accounts for VMEM tile padding of
    the last two dims (sublane granule per dtype, 128 lanes) and the default
    double-buffering, plus ~2 MiB headroom.  Small floor for compiler scratch;
    well under v7x's 64 MiB either way."""
    total = 0
    for shape, dtype, nbuf in blocks:
        it = jnp.dtype(dtype).itemsize
        sub = {4: 8, 2: 16, 1: 32}.get(it, 8)
        lead = 1
        for s in shape[:-2]:
            lead *= int(s)
        r, c = int(shape[-2]), int(shape[-1])
        total += nbuf * lead * _ceil_to(r, sub) * _ceil_to(c, 128) * it
    return int(min(max(total + (2 << 20), 8 << 20), 48 << 20))


# ----------------------------------------------------------------------------
# Kernel 1: single-K-block matmul + bias (+ReLU).  bf16 x bf16 -> f32 acc.
# Grid iterates over M tiles ("parallel"); weights/bias stay resident.
# ----------------------------------------------------------------------------
def _matmul_bias_act_kernel(x_ref, w_ref, b_ref, o_ref, *, relu):
    acc = jnp.dot(x_ref[...], w_ref[...], preferred_element_type=jnp.float32)
    acc = acc + b_ref[...]
    if relu:
        acc = jnp.maximum(acc, 0.0)
    o_ref[...] = acc.astype(o_ref.dtype)


def pallas_linear(x, w, b, *, relu, out_dtype=jnp.bfloat16, tm_max=2048):
    """y = relu?(x @ w + b).  x:(M,K) bf16, w:(K,N) bf16, b:(1,N) f32."""
    M, K = x.shape
    Kw, N = w.shape
    assert K == Kw, (K, Kw)

    tm = _pick_tm(M, tm_max)
    Mp = _ceil_to(M, tm)
    if Mp != M:
        x = jnp.pad(x, ((0, Mp - M), (0, 0)))

    vmem = _vmem_limit_bytes(
        ((tm, K), x.dtype, 2), ((K, N), w.dtype, 2),
        ((1, N), b.dtype, 2), ((tm, N), out_dtype, 2))

    out = pl.pallas_call(
        functools.partial(_matmul_bias_act_kernel, relu=relu),
        out_shape=jax.ShapeDtypeStruct((Mp, N), out_dtype),
        grid_spec=pltpu.PrefetchScalarGridSpec(
            num_scalar_prefetch=0,
            grid=(Mp // tm,),
            in_specs=[
                pl.BlockSpec((tm, K), lambda i: (i, 0)),
                pl.BlockSpec((K, N), lambda i: (0, 0)),
                pl.BlockSpec((1, N), lambda i: (0, 0)),
            ],
            out_specs=pl.BlockSpec((tm, N), lambda i: (i, 0)),
        ),
        compiler_params=pltpu.CompilerParams(
            dimension_semantics=("parallel",),
            vmem_limit_bytes=vmem,
        ),
    )(x, w, b)
    return out if Mp == M else out[:M]


# ----------------------------------------------------------------------------
# Kernel 2: fused MLP head  relu(x@W1+b1) @ W2 + b2.  Hidden stays in VMEM.
# ----------------------------------------------------------------------------
def _mlp_kernel(x_ref, w1_ref, b1_ref, w2_ref, b2_ref, o_ref):
    h = jnp.dot(x_ref[...], w1_ref[...], preferred_element_type=jnp.float32)
    h = jnp.maximum(h + b1_ref[...], 0.0)
    o = jnp.dot(h.astype(w2_ref.dtype), w2_ref[...],
                preferred_element_type=jnp.float32)
    o_ref[...] = (o + b2_ref[...]).astype(o_ref.dtype)


def pallas_mlp(x, w1, b1, w2, b2, *, tm_max=256):
    """x:(M,K1) bf16, w1:(K1,H) bf16, b1:(1,H) f32, w2:(H,N2) bf16,
    b2:(1,N2) f32 -> (M, N2) f32."""
    M, K1 = x.shape
    _, H = w1.shape
    _, N2 = w2.shape

    tm = _pick_tm(M, tm_max)
    Mp = _ceil_to(M, tm)
    if Mp != M:
        x = jnp.pad(x, ((0, Mp - M), (0, 0)))

    vmem = _vmem_limit_bytes(
        ((tm, K1), x.dtype, 2), ((K1, H), w1.dtype, 2), ((1, H), b1.dtype, 2),
        ((H, N2), w2.dtype, 2), ((1, N2), b2.dtype, 2),
        ((tm, N2), jnp.float32, 2), ((tm, H), jnp.float32, 1))

    out = pl.pallas_call(
        _mlp_kernel,
        out_shape=jax.ShapeDtypeStruct((Mp, N2), jnp.float32),
        grid_spec=pltpu.PrefetchScalarGridSpec(
            num_scalar_prefetch=0,
            grid=(Mp // tm,),
            in_specs=[
                pl.BlockSpec((tm, K1), lambda i: (i, 0)),
                pl.BlockSpec((K1, H), lambda i: (0, 0)),
                pl.BlockSpec((1, H), lambda i: (0, 0)),
                pl.BlockSpec((H, N2), lambda i: (0, 0)),
                pl.BlockSpec((1, N2), lambda i: (0, 0)),
            ],
            out_specs=pl.BlockSpec((tm, N2), lambda i: (i, 0)),
        ),
        compiler_params=pltpu.CompilerParams(
            dimension_semantics=("parallel",),
            vmem_limit_bytes=vmem,
        ),
    )(x, w1, b1, w2, b2)
    return out if Mp == M else out[:M]


# ----------------------------------------------------------------------------
# im2col for NHWC input via kh*kw strided slices + one concat (no gathers).
# Patch columns ordered (kh, kw, C) to match the pre-transposed conv weights;
# zero columns appended so K is a multiple of 128 (lane-aligned loads).
# ----------------------------------------------------------------------------
def im2col_nhwc(x, kh, kw, stride):
    B, H, W, C = x.shape
    OH = (H - kh) // stride + 1
    OW = (W - kw) // stride + 1
    cols = []
    for dh in range(kh):
        for dw in range(kw):
            sl = jax.lax.slice(
                x,
                (0, dh, dw, 0),
                (B, dh + (OH - 1) * stride + 1, dw + (OW - 1) * stride + 1, C),
                (1, stride, stride, 1))                 # (B, OH, OW, C)
            cols.append(sl)
    K = kh * kw * C
    Kp = _ceil_to(K, 128)
    if Kp != K:
        cols.append(jnp.zeros((B, OH, OW, Kp - K), x.dtype))
    patches = jnp.concatenate(cols, axis=-1)            # (B, OH, OW, Kp)
    return patches.reshape(B * OH * OW, Kp), OH, OW


# ----------------------------------------------------------------------------
# Deterministic parameter init (PyTorch-style uniform(-1/sqrt(fan_in), ...)).
# ----------------------------------------------------------------------------
def init_params(key, input_channels, input_size, n_output):
    kernels, strides, channels = [8, 4, 3], [4, 2, 1], [32, 64, 64]
    c0 = (input_size - kernels[0]) // strides[0] + 1
    c1 = (c0 - kernels[1]) // strides[1] + 1
    c2 = (c1 - kernels[2]) // strides[2] + 1
    conv_out = channels[2] * c2 * c2

    def u(k, shape, fan_in):
        bound = 1.0 / jnp.sqrt(jnp.float32(fan_in))
        return jax.random.uniform(k, shape, jnp.float32, -bound, bound)

    ks = jax.random.split(key, 10)
    p = {}
    p["w1"] = u(ks[0], (channels[0], input_channels, 8, 8), input_channels * 64)
    p["b1"] = u(ks[1], (channels[0],), input_channels * 64)
    p["w2"] = u(ks[2], (channels[1], channels[0], 4, 4), channels[0] * 16)
    p["b2"] = u(ks[3], (channels[1],), channels[0] * 16)
    p["w3"] = u(ks[4], (channels[2], channels[1], 3, 3), channels[1] * 9)
    p["b3"] = u(ks[5], (channels[2],), channels[1] * 9)
    p["wl1"] = u(ks[6], (512, conv_out), conv_out)
    p["bl1"] = u(ks[7], (512,), conv_out)
    p["wl2"] = u(ks[8], (n_output, 512), 512)
    p["bl2"] = u(ks[9], (512,), 512)[:n_output] * 0 + u(ks[9], (n_output,), 512)
    return p


# ----------------------------------------------------------------------------
# One-time parameter prep: transpose to matmul layout, fold 1/256 into w1
# (the module divides by 256, not 255), pad K to a multiple of 128, permute
# wl1 columns (NCHW flatten -> NHWC flatten), cast matmul operands to bf16.
# ----------------------------------------------------------------------------
def prepare_params(params):
    def conv_w(w):  # (OC, IC, KH, KW) -> (ceil128(KH*KW*IC), OC), bf16
        oc, ic, khh, kww = w.shape
        m = w.transpose(2, 3, 1, 0).reshape(khh * kww * ic, oc)
        K = m.shape[0]
        Kp = _ceil_to(K, 128)
        if Kp != K:
            m = jnp.pad(m, ((0, Kp - K), (0, 0)))
        return m.astype(jnp.bfloat16)

    def bias2d(b):
        return b.astype(jnp.float32).reshape(1, -1)

    p = {}
    p["w1"] = conv_w(params["w1"].astype(jnp.float32) / 256.0)  # exact fold
    p["b1"] = bias2d(params["b1"])
    p["w2"] = conv_w(params["w2"])
    p["b2"] = bias2d(params["b2"])
    p["w3"] = conv_w(params["w3"])
    p["b3"] = bias2d(params["b3"])

    # Linear(conv_out, 512): PyTorch flattens NCHW; our activations are
    # NHWC-flat, so permute the weight columns once here.
    wl1 = params["wl1"]                                   # (512, 64*s*s)
    C = 64
    hw = wl1.shape[1] // C
    s = int(round(hw ** 0.5))
    w1mat = wl1.reshape(512, C, s, s).transpose(2, 3, 1, 0).reshape(-1, 512)
    p["wl1"] = w1mat.astype(jnp.bfloat16)                 # (conv_out, 512)
    p["bl1"] = bias2d(params["bl1"])
    p["wl2"] = params["wl2"].T.astype(jnp.bfloat16)       # (512, n_output)
    p["bl2"] = bias2d(params["bl2"])
    return p


# ----------------------------------------------------------------------------
# Forward pass == DQN_Conv.forward (bf16 matmuls, f32 accumulation).
# ----------------------------------------------------------------------------
def dqn_conv_forward(x, prep):
    B = x.shape[0]
    x = jnp.transpose(x, (0, 2, 3, 1))       # NCHW -> NHWC while still uint8
    # uint8 values 0..255 are exact in bf16; the /256 lives in prep["w1"].
    x = x.astype(jnp.bfloat16)

    # conv1 (8x8, s4) + ReLU
    patches, oh, ow = im2col_nhwc(x, 8, 8, 4)
    y = pallas_linear(patches, prep["w1"], prep["b1"], relu=True)
    x = y.reshape(B, oh, ow, 32)

    # conv2 (4x4, s2) + ReLU
    patches, oh, ow = im2col_nhwc(x, 4, 4, 2)
    y = pallas_linear(patches, prep["w2"], prep["b2"], relu=True)
    x = y.reshape(B, oh, ow, 64)

    # conv3 (3x3, s1) + ReLU
    patches, oh, ow = im2col_nhwc(x, 3, 3, 1)
    y = pallas_linear(patches, prep["w3"], prep["b3"], relu=True)

    # NHWC-flat; wl1 rows were permuted at prep time to match PyTorch's
    # NCHW view(B, -1).
    x = y.reshape(B, -1)

    # Fused Linear(conv_out,512)+ReLU -> Linear(512,n_output), one pallas_call.
    return pallas_mlp(x, prep["wl1"], prep["bl1"], prep["wl2"], prep["bl2"])


if __name__ == "__main__":
    # Small shapes consistent with the module: input_size=36 makes the conv
    # sizes integral (36 -> 8 -> 3 -> 1), conv_out = 64.
    B, C, S, N_OUT = 2, 4, 36, 6

    key = jax.random.PRNGKey(0)
    k_x, k_p = jax.random.split(key)
    x = jax.random.randint(k_x, (B, C, S, S), 0, 256).astype(jnp.uint8)
    params = init_params(k_p, C, S, N_OUT)
    prep = prepare_params(params)   # one-time weight layout / scale / bf16 prep

    fwd = jax.jit(dqn_conv_forward)
    q = fwd(x, prep)
    jax.block_until_ready(q)
    assert q.shape == (B, N_OUT), q.shape
    print("KERNEL_OK")
</pallas_src>

<mosaic_0001>
module attributes {stable_mosaic.version = 11 : i64} {
  func.func @_matmul_bias_act_kernel(%arg0: i32, %arg1: memref<64x256xbf16, #tpu.memory_space<vmem>>, %arg2: memref<256x32xbf16, #tpu.memory_space<vmem>>, %arg3: memref<1x32xf32, #tpu.memory_space<vmem>>, %arg4: memref<64x32xbf16, #tpu.memory_space<vmem>>) attributes {dimension_semantics = [#tpu.dimension_semantics<parallel>], iteration_bounds = array<i64: 2>, scalar_prefetch = 0 : i64, scratch_operands = 0 : i64, tpu.core_type = #tpu.core_type<tc>, window_params = [{transform_indices = @transform_0, window_bounds = array<i64: 64, 256>}, {pipeline_mode = #tpu.pipeline_mode<synchronous>, transform_indices = @transform_1, window_bounds = array<i64: 256, 32>}, {pipeline_mode = #tpu.pipeline_mode<synchronous>, transform_indices = @transform_2, window_bounds = array<i64: 1, 32>}, {transform_indices = @transform_3, window_bounds = array<i64: 64, 32>}]} {
    %c0 = arith.constant 0 : index
    %c0_0 = arith.constant 0 : index
    %0 = vector.load %arg1[%c0, %c0_0] : memref<64x256xbf16, #tpu.memory_space<vmem>>, vector<64x256xbf16>
    %c0_1 = arith.constant 0 : index
    %c0_2 = arith.constant 0 : index
    %1 = vector.load %arg2[%c0_1, %c0_2] : memref<256x32xbf16, #tpu.memory_space<vmem>>, vector<256x32xbf16>
    %cst = arith.constant dense<0.000000e+00> : vector<64x32xf32>
    %2 = tpu.matmul %0, %1, %cst {dimension_numbers = #tpu.dot_dimension_numbers<[1], [0], [0], [1], [0, 0, 1, 1], [], []>} : vector<64x256xbf16>, vector<256x32xbf16>, vector<64x32xf32> -> vector<64x32xf32>
    %c0_3 = arith.constant 0 : index
    %c0_4 = arith.constant 0 : index
    %3 = vector.load %arg3[%c0_3, %c0_4] : memref<1x32xf32, #tpu.memory_space<vmem>>, vector<1x32xf32>
    %4 = vector.broadcast %3 : vector<1x32xf32> to vector<64x32xf32>
    %5 = arith.addf %2, %4 : vector<64x32xf32>
    %cst_5 = arith.constant 0.000000e+00 : f32
    %6 = vector.broadcast %cst_5 : f32 to vector<64x32xf32>
    %7 = arith.maximumf %5, %6 : vector<64x32xf32>
    %8 = arith.truncf %7 : vector<64x32xf32> to vector<64x32xbf16>
    %c0_6 = arith.constant 0 : index
    %c0_7 = arith.constant 0 : index
    %9 = vector.load %arg4[%c0_6, %c0_7] : memref<64x32xbf16, #tpu.memory_space<vmem>>, vector<64x32xbf16>
    tpu.vector_store %arg4[%c0_6, %c0_7], %8 {strides = array<i32>} : memref<64x32xbf16, #tpu.memory_space<vmem>>, vector<64x32xbf16>,
    return
  }
  func.func @transform_0(%arg0: i32) -> (i32, i32) {
    %c0_i32 = arith.constant 0 : i32
    %c0_i32_0 = arith.constant 0 : i32
    return %arg0, %c0_i32 : i32, i32
  }
  func.func @transform_1(%arg0: i32) -> (i32, i32) {
    %c0_i32 = arith.constant 0 : i32
    %c0_i32_0 = arith.constant 0 : i32
    %c0_i32_1 = arith.constant 0 : i32
    return %c0_i32, %c0_i32_0 : i32, i32
  }
  func.func @transform_2(%arg0: i32) -> (i32, i32) {
    %c0_i32 = arith.constant 0 : i32
    %c0_i32_0 = arith.constant 0 : i32
    %c0_i32_1 = arith.constant 0 : i32
    return %c0_i32, %c0_i32_0 : i32, i32
  }
  func.func @transform_3(%arg0: i32) -> (i32, i32) {
    %c0_i32 = arith.constant 0 : i32
    %c0_i32_0 = arith.constant 0 : i32
    return %arg0, %c0_i32 : i32, i32
  }
}

module attributes {stable_mosaic.version = 11 : i64} {
  func.func @_matmul_bias_act_kernel(%arg0: i32, %arg1: memref<16x512xbf16, #tpu.memory_space<vmem>>, %arg2: memref<512x64xbf16, #tpu.memory_space<vmem>>, %arg3: memref<1x64xf32, #tpu.memory_space<vmem>>, %arg4: memref<16x64xbf16, #tpu.memory_space<vmem>>) attributes {dimension_semantics = [#tpu.dimension_semantics<parallel>], iteration_bounds = array<i64: 2>, scalar_prefetch = 0 : i64, scratch_operands = 0 : i64, tpu.core_type = #tpu.core_type<tc>, window_params = [{transform_indices = @transform_0, window_bounds = array<i64: 16, 512>}, {pipeline_mode = #tpu.pipeline_mode<synchronous>, transform_indices = @transform_1, window_bounds = array<i64: 512, 64>}, {pipeline_mode = #tpu.pipeline_mode<synchronous>, transform_indices = @transform_2, window_bounds = array<i64: 1, 64>}, {transform_indices = @transform_3, window_bounds = array<i64: 16, 64>}]} {
    %c0 = arith.constant 0 : index
    %c0_0 = arith.constant 0 : index
    %0 = vector.load %arg1[%c0, %c0_0] : memref<16x512xbf16, #tpu.memory_space<vmem>>, vector<16x512xbf16>
    %c0_1 = arith.constant 0 : index
    %c0_2 = arith.constant 0 : index
    %1 = vector.load %arg2[%c0_1, %c0_2] : memref<512x64xbf16, #tpu.memory_space<vmem>>, vector<512x64xbf16>
    %cst = arith.constant dense<0.000000e+00> : vector<16x64xf32>
    %2 = tpu.matmul %0, %1, %cst {dimension_numbers = #tpu.dot_dimension_numbers<[1], [0], [0], [1], [0, 0, 1, 1], [], []>} : vector<16x512xbf16>, vector<512x64xbf16>, vector<16x64xf32> -> vector<16x64xf32>
    %c0_3 = arith.constant 0 : index
    %c0_4 = arith.constant 0 : index
    %3 = vector.load %arg3[%c0_3, %c0_4] : memref<1x64xf32, #tpu.memory_space<vmem>>, vector<1x64xf32>
    %4 = vector.broadcast %3 : vector<1x64xf32> to vector<16x64xf32>
    %5 = arith.addf %2, %4 : vector<16x64xf32>
    %cst_5 = arith.constant 0.000000e+00 : f32
    %6 = vector.broadcast %cst_5 : f32 to vector<16x64xf32>
    %7 = arith.maximumf %5, %6 : vector<16x64xf32>
    %8 = arith.truncf %7 : vector<16x64xf32> to vector<16x64xbf16>
    %c0_6 = arith.constant 0 : index
    %c0_7 = arith.constant 0 : index
    %9 = vector.load %arg4[%c0_6, %c0_7] : memref<16x64xbf16, #tpu.memory_space<vmem>>, vector<16x64xbf16>
    tpu.vector_store %arg4[%c0_6, %c0_7], %8 {strides = array<i32>} : memref<16x64xbf16, #tpu.memory_space<vmem>>, vector<16x64xbf16>,
    return
  }
  func.func @transform_0(%arg0: i32) -> (i32, i32) {
    %c0_i32 = arith.constant 0 : i32
    %c0_i32_0 = arith.constant 0 : i32
    return %arg0, %c0_i32 : i32, i32
  }
  func.func @transform_1(%arg0: i32) -> (i32, i32) {
    %c0_i32 = arith.constant 0 : i32
    %c0_i32_0 = arith.constant 0 : i32
    %c0_i32_1 = arith.constant 0 : i32
    return %c0_i32, %c0_i32_0 : i32, i32
  }
  func.func @transform_2(%arg0: i32) -> (i32, i32) {
    %c0_i32 = arith.constant 0 : i32
    %c0_i32_0 = arith.constant 0 : i32
    %c0_i32_1 = arith.constant 0 : i32
    return %c0_i32, %c0_i32_0 : i32, i32
  }
  func.func @transform_3(%arg0: i32) -> (i32, i32) {
    %c0_i32 = arith.constant 0 : i32
    %c0_i32_0 = arith.constant 0 : i32
    return %arg0, %c0_i32 : i32, i32
  }
}

module attributes {stable_mosaic.version = 11 : i64} {
  func.func @_matmul_bias_act_kernel(%arg0: i32, %arg1: memref<16x640xbf16, #tpu.memory_space<vmem>>, %arg2: memref<640x64xbf16, #tpu.memory_space<vmem>>, %arg3: memref<1x64xf32, #tpu.memory_space<vmem>>, %arg4: memref<16x64xbf16, #tpu.memory_space<vmem>>) attributes {dimension_semantics = [#tpu.dimension_semantics<parallel>], iteration_bounds = array<i64: 1>, scalar_prefetch = 0 : i64, scratch_operands = 0 : i64, tpu.core_type = #tpu.core_type<tc>, window_params = [{transform_indices = @transform_0, window_bounds = array<i64: 16, 640>}, {pipeline_mode = #tpu.pipeline_mode<synchronous>, transform_indices = @transform_1, window_bounds = array<i64: 640, 64>}, {pipeline_mode = #tpu.pipeline_mode<synchronous>, transform_indices = @transform_2, window_bounds = array<i64: 1, 64>}, {transform_indices = @transform_3, window_bounds = array<i64: 16, 64>}]} {
    %c0 = arith.constant 0 : index
    %c0_0 = arith.constant 0 : index
    %0 = vector.load %arg1[%c0, %c0_0] : memref<16x640xbf16, #tpu.memory_space<vmem>>, vector<16x640xbf16>
    %c0_1 = arith.constant 0 : index
    %c0_2 = arith.constant 0 : index
    %1 = vector.load %arg2[%c0_1, %c0_2] : memref<640x64xbf16, #tpu.memory_space<vmem>>, vector<640x64xbf16>
    %cst = arith.constant dense<0.000000e+00> : vector<16x64xf32>
    %2 = tpu.matmul %0, %1, %cst {dimension_numbers = #tpu.dot_dimension_numbers<[1], [0], [0], [1], [0, 0, 1, 1], [], []>} : vector<16x640xbf16>, vector<640x64xbf16>, vector<16x64xf32> -> vector<16x64xf32>
    %c0_3 = arith.constant 0 : index
    %c0_4 = arith.constant 0 : index
    %3 = vector.load %arg3[%c0_3, %c0_4] : memref<1x64xf32, #tpu.memory_space<vmem>>, vector<1x64xf32>
    %4 = vector.broadcast %3 : vector<1x64xf32> to vector<16x64xf32>
    %5 = arith.addf %2, %4 : vector<16x64xf32>
    %cst_5 = arith.constant 0.000000e+00 : f32
    %6 = vector.broadcast %cst_5 : f32 to vector<16x64xf32>
    %7 = arith.maximumf %5, %6 : vector<16x64xf32>
    %8 = arith.truncf %7 : vector<16x64xf32> to vector<16x64xbf16>
    %c0_6 = arith.constant 0 : index
    %c0_7 = arith.constant 0 : index
    %9 = vector.load %arg4[%c0_6, %c0_7] : memref<16x64xbf16, #tpu.memory_space<vmem>>, vector<16x64xbf16>
    tpu.vector_store %arg4[%c0_6, %c0_7], %8 {strides = array<i32>} : memref<16x64xbf16, #tpu.memory_space<vmem>>, vector<16x64xbf16>,
    return
  }
  func.func @transform_0(%arg0: i32) -> (i32, i32) {
    %c0_i32 = arith.constant 0 : i32
    %c0_i32_0 = arith.constant 0 : i32
    return %arg0, %c0_i32 : i32, i32
  }
  func.func @transform_1(%arg0: i32) -> (i32, i32) {
    %c0_i32 = arith.constant 0 : i32
    %c0_i32_0 = arith.constant 0 : i32
    %c0_i32_1 = arith.constant 0 : i32
    return %c0_i32, %c0_i32_0 : i32, i32
  }
  func.func @transform_2(%arg0: i32) -> (i32, i32) {
    %c0_i32 = arith.constant 0 : i32
    %c0_i32_0 = arith.constant 0 : i32
    %c0_i32_1 = arith.constant 0 : i32
    return %c0_i32, %c0_i32_0 : i32, i32
  }
  func.func @transform_3(%arg0: i32) -> (i32, i32) {
    %c0_i32 = arith.constant 0 : i32
    %c0_i32_0 = arith.constant 0 : i32
    return %arg0, %c0_i32 : i32, i32
  }
}

module attributes {stable_mosaic.version = 11 : i64} {
  func.func @_mlp_kernel(%arg0: i32, %arg1: memref<16x64xbf16, #tpu.memory_space<vmem>>, %arg2: memref<64x512xbf16, #tpu.memory_space<vmem>>, %arg3: memref<1x512xf32, #tpu.memory_space<vmem>>, %arg4: memref<512x6xbf16, #tpu.memory_space<vmem>>, %arg5: memref<1x6xf32, #tpu.memory_space<vmem>>, %arg6: memref<16x6xf32, #tpu.memory_space<vmem>>) attributes {dimension_semantics = [#tpu.dimension_semantics<parallel>], iteration_bounds = array<i64: 1>, scalar_prefetch = 0 : i64, scratch_operands = 0 : i64, tpu.core_type = #tpu.core_type<tc>, window_params = [{transform_indices = @transform_0, window_bounds = array<i64: 16, 64>}, {pipeline_mode = #tpu.pipeline_mode<synchronous>, transform_indices = @transform_1, window_bounds = array<i64: 64, 512>}, {pipeline_mode = #tpu.pipeline_mode<synchronous>, transform_indices = @transform_2, window_bounds = array<i64: 1, 512>}, {pipeline_mode = #tpu.pipeline_mode<synchronous>, transform_indices = @transform_3, window_bounds = array<i64: 512, 6>}, {pipeline_mode = #tpu.pipeline_mode<synchronous>, transform_indices = @transform_4, window_bounds = array<i64: 1, 6>}, {transform_indices = @transform_5, window_bounds = array<i64: 16, 6>}]} {
    %c0 = arith.constant 0 : index
    %c0_0 = arith.constant 0 : index
    %0 = vector.load %arg1[%c0, %c0_0] : memref<16x64xbf16, #tpu.memory_space<vmem>>, vector<16x64xbf16>
    %c0_1 = arith.constant 0 : index
    %c0_2 = arith.constant 0 : index
    %1 = vector.load %arg2[%c0_1, %c0_2] : memref<64x512xbf16, #tpu.memory_space<vmem>>, vector<64x512xbf16>
    %cst = arith.constant dense<0.000000e+00> : vector<16x512xf32>
    %2 = tpu.matmul %0, %1, %cst {dimension_numbers = #tpu.dot_dimension_numbers<[1], [0], [0], [1], [0, 0, 1, 1], [], []>} : vector<16x64xbf16>, vector<64x512xbf16>, vector<16x512xf32> -> vector<16x512xf32>
    %c0_3 = arith.constant 0 : index
    %c0_4 = arith.constant 0 : index
    %3 = vector.load %arg3[%c0_3, %c0_4] : memref<1x512xf32, #tpu.memory_space<vmem>>, vector<1x512xf32>
    %4 = vector.broadcast %3 : vector<1x512xf32> to vector<16x512xf32>
    %5 = arith.addf %2, %4 : vector<16x512xf32>
    %cst_5 = arith.constant 0.000000e+00 : f32
    %6 = vector.broadcast %cst_5 : f32 to vector<16x512xf32>
    %7 = arith.maximumf %5, %6 : vector<16x512xf32>
    %8 = arith.truncf %7 : vector<16x512xf32> to vector<16x512xbf16>
    %c0_6 = arith.constant 0 : index
    %c0_7 = arith.constant 0 : index
    %9 = vector.load %arg4[%c0_6, %c0_7] : memref<512x6xbf16, #tpu.memory_space<vmem>>, vector<512x6xbf16>
    %cst_8 = arith.constant dense<0.000000e+00> : vector<16x6xf32>
    %10 = tpu.matmul %8, %9, %cst_8 {dimension_numbers = #tpu.dot_dimension_numbers<[1], [0], [0], [1], [0, 0, 1, 1], [], []>} : vector<16x512xbf16>, vector<512x6xbf16>, vector<16x6xf32> -> vector<16x6xf32>
    %c0_9 = arith.constant 0 : index
    %c0_10 = arith.constant 0 : index
    %11 = vector.load %arg5[%c0_9, %c0_10] : memref<1x6xf32, #tpu.memory_space<vmem>>, vector<1x6xf32>
    %12 = vector.broadcast %11 : vector<1x6xf32> to vector<16x6xf32>
    %13 = arith.addf %10, %12 : vector<16x6xf32>
    %c0_11 = arith.constant 0 : index
    %c0_12 = arith.constant 0 : index
    %14 = vector.load %arg6[%c0_11, %c0_12] : memref<16x6xf32, #tpu.memory_space<vmem>>, vector<16x6xf32>
    tpu.vector_store %arg6[%c0_11, %c0_12], %13 {strides = array<i32>} : memref<16x6xf32, #tpu.memory_space<vmem>>, vector<16x6xf32>,
    return
  }
  func.func @transform_0(%arg0: i32) -> (i32, i32) {
    %c0_i32 = arith.constant 0 : i32
    %c0_i32_0 = arith.constant 0 : i32
    return %arg0, %c0_i32 : i32, i32
  }
  func.func @transform_1(%arg0: i32) -> (i32, i32) {
    %c0_i32 = arith.constant 0 : i32
    %c0_i32_0 = arith.constant 0 : i32
    %c0_i32_1 = arith.constant 0 : i32
    return %c0_i32, %c0_i32_0 : i32, i32
  }
  func.func @transform_2(%arg0: i32) -> (i32, i32) {
    %c0_i32 = arith.constant 0 : i32
    %c0_i32_0 = arith.constant 0 : i32
    %c0_i32_1 = arith.constant 0 : i32
    return %c0_i32, %c0_i32_0 : i32, i32
  }
  func.func @transform_3(%arg0: i32) -> (i32, i32) {
    %c0_i32 = arith.constant 0 : i32
    %c0_i32_0 = arith.constant 0 : i32
    %c0_i32_1 = arith.constant 0 : i32
    return %c0_i32, %c0_i32_0 : i32, i32
  }
  func.func @transform_4(%arg0: i32) -> (i32, i32) {
    %c0_i32 = arith.constant 0 : i32
    %c0_i32_0 = arith.constant 0 : i32
    %c0_i32_1 = arith.constant 0 : i32
    return %c0_i32, %c0_i32_0 : i32, i32
  }
  func.func @transform_5(%arg0: i32) -> (i32, i32) {
    %c0_i32 = arith.constant 0 : i32
    %c0_i32_0 = arith.constant 0 : i32
    return %arg0, %c0_i32 : i32, i32
  }
}

</mosaic_0001>

<llo_original>
// kernel: dqn_conv_forward.4
$region0: #{dqn_conv_forward.4}
  #allocation0 [shape = 'u32[]', space=smem, size = 0x4, offset = 0x4, fixed_abs, tag = 'smem constant byte address 0x4 - core index']
  #allocation1 [shape = 'u32[144,128]{1,0:T(1,128)}', space=vmem, size = 0x12000, scoped, tag = 'internal scratch']
  %s0 = inlined_call_operand.vmem [shape: bf16[128,256], index: 0, kind: input, shape index: {}]
  %s1 = inlined_call_operand.vmem [shape: bf16[256,32], index: 1, kind: input, shape index: {}]
  %s2 = inlined_call_operand.vmem [shape: f32[1,32], index: 2, kind: input, shape index: {}]
  %s3 = inlined_call_operand.vmem [shape: bf16[128,32], index: 3, kind: output, shape index: {}]
  %s4 = sld [smem:[#allocation0]]
  $region45: #{dqn_conv_forward.4} parent=0
    _
  %s6 = ssub.s32 1, %s4
  %s7 = scalar_select 0, %s6, %s4
  loop: start=0, step=1, limit=4
  $region2: #{dqn_conv_forward.4} parent=0 // loop_pre_header
    _
  $region3: #{dqn_conv_forward.4} parent=0 // loop_header
    %s9 = sphi 0, %s13
    %p10 = scmp.ge.s32.totalorder %s9, 4
    %s19 = sphi 0, %s21
    %s22 = sphi 0, %s19
    %s23 = sphi 0, %s22
    %s39 = sphi 0, %s23
    %s43 = sphi 0, %s43
    %s45 = sphi 0, %s43
    %s46 = sphi 0, %s45
    %s60 = sphi 0, %s46
    %s64 = sphi 0, %s64
    %s66 = sphi 0, %s64
    %s67 = sphi 0, %s66
    %s81 = sphi 0, %s67
    %s87 = sphi 0, %s89
    %s90 = sphi 0, %s87
    %s91 = sphi 0, %s90
    %s107 = sphi 0, %s91
  $region4: #{dqn_conv_forward.4} parent=0 // loop_header_branch
    %12 = sbr.rel (%p10) target = $region8
  $region5: #{dqn_conv_forward.4} parent=0 // loop_body
    %s14 = ssub.s32 %s9, 1
    %s15 = ssub.s32 %s9, 2
    %s16 = sadd.s32 %s9, 1
    %s17 = ssub.s32 %s9, %s16
    %p18 = scmp.eq.s32.totalorder %s17, 0
    %s20 = sadd.s32 %s19, 1
    %s21 = scalar_select %p18, %s19, %s20
    %p24 = pneg %p18
    %p25 = scmp.eq.s32.totalorder %s9, 1
    %p26 = por %p24, %p25
    %p27 = scmp.ne.s32.totalorder %s19, %s22
    %p28 = scmp.eq.s32.totalorder %s9, 0
    %p29 = por %p27, %p28
    %p30 = scmp.ne.s32.totalorder %s19, %s22
    %p31 = scmp.eq.s32.totalorder %s14, 1
    %p32 = por %p30, %p31
    %p33 = scmp.ne.s32.totalorder %s22, %s23
    %p34 = scmp.eq.s32.totalorder %s14, 0
    %p35 = por %p33, %p34
    %p36 = scmp.ne.s32.totalorder %s22, %s23
    %p37 = scmp.eq.s32.totalorder %s15, 1
    %p38 = por %p36, %p37
    %p40 = scmp.ne.s32.totalorder %s23, %s39
    %p41 = scmp.eq.s32.totalorder %s15, 0
    %p42 = por %p40, %p41
    %s44 = sadd.s32 %s43, 1
    %p47 = scmp.eq.s32.totalorder %s9, 1
    %p48 = scmp.ne.s32.totalorder %s43, %s45
    %p49 = scmp.eq.s32.totalorder %s9, 0
    %p50 = por %p48, %p49
    %p51 = scmp.ne.s32.totalorder %s43, %s45
    %p52 = scmp.eq.s32.totalorder %s14, 1
    %p53 = por %p51, %p52
    %p54 = scmp.ne.s32.totalorder %s45, %s46
    %p55 = scmp.eq.s32.totalorder %s14, 0
    %p56 = por %p54, %p55
    %p57 = scmp.ne.s32.totalorder %s45, %s46
    %p58 = scmp.eq.s32.totalorder %s15, 1
    %p59 = por %p57, %p58
    %p61 = scmp.ne.s32.totalorder %s46, %s60
    %p62 = scmp.eq.s32.totalorder %s15, 0
    %p63 = por %p61, %p62
    %s65 = sadd.s32 %s64, 1
    %p68 = scmp.eq.s32.totalorder %s9, 1
    %p69 = scmp.ne.s32.totalorder %s64, %s66
    %p70 = scmp.eq.s32.totalorder %s9, 0
    %p71 = por %p69, %p70
    %p72 = scmp.ne.s32.totalorder %s64, %s66
    %p73 = scmp.eq.s32.totalorder %s14, 1
    %p74 = por %p72, %p73
    %p75 = scmp.ne.s32.totalorder %s66, %s67
    %p76 = scmp.eq.s32.totalorder %s14, 0
    %p77 = por %p75, %p76
    %p78 = scmp.ne.s32.totalorder %s66, %s67
    %p79 = scmp.eq.s32.totalorder %s15, 1
    %p80 = por %p78, %p79
    %p82 = scmp.ne.s32.totalorder %s67, %s81
    %p83 = scmp.eq.s32.totalorder %s15, 0
    %p84 = por %p82, %p83
    %s85 = ssub.s32 %s9, %s16
    %p86 = scmp.eq.s32.totalorder %s85, 0
    %s88 = sadd.s32 %s87, 1
    %s89 = scalar_select %p86, %s87, %s88
    %p92 = pneg %p86
    %p93 = scmp.eq.s32.totalorder %s9, 1
    %p94 = por %p92, %p93
    %p95 = scmp.ne.s32.totalorder %s87, %s90
    %p96 = scmp.eq.s32.totalorder %s9, 0
    %p97 = por %p95, %p96
    %p98 = scmp.ne.s32.totalorder %s87, %s90
    %p99 = scmp.eq.s32.totalorder %s14, 1
    %p100 = por %p98, %p99
    %p101 = scmp.ne.s32.totalorder %s90, %s91
    %p102 = scmp.eq.s32.totalorder %s14, 0
    %p103 = por %p101, %p102
    %p104 = scmp.ne.s32.totalorder %s90, %s91
    %p105 = scmp.eq.s32.totalorder %s15, 1
    %p106 = por %p104, %p105
    %p108 = scmp.ne.s32.totalorder %s91, %s107
    %p109 = scmp.eq.s32.totalorder %s15, 0
    %p110 = por %p108, %p109
    %p111 = scmp.le.s32.totalorder 1, %s9
    %p112 = scmp.lt.s32.totalorder %s9, 3
    %p113 = pnand %p111, %p112
    %p114 = pneg %p113
    // Predicated region
    $region9: #{dqn_conv_forward.4} parent=5 // pred_check
      _
    $region10: #{dqn_conv_forward.4} parent=5 // pred_check_branch
      %116 = sbr.rel (%p113) target = $region12
    $region11: #{dqn_conv_forward.4} parent=5 // pred_region
      %s117 = ssub.s32 %s9, 1
      // Predicated region
      $region13: #{dqn_conv_forward.4} parent=11 // pred_check
        %p118 = pneg %p56
      $region14: #{dqn_conv_forward.4} parent=11 // pred_check_branch
        %120 = sbr.rel (%p118) target = $region16
      $region15: #{dqn_conv_forward.4} parent=11 // pred_region
        _
      $region16: #{dqn_conv_forward.4} parent=11 // pred_fallthru
        _
      // Predicated region
      $region17: #{dqn_conv_forward.4} parent=11 // pred_check
        %p121 = pneg %p77
      $region18: #{dqn_conv_forward.4} parent=11 // pred_check_branch
        %123 = sbr.rel (%p121) target = $region20
      $region19: #{dqn_conv_forward.4} parent=11 // pred_region
        _
      $region20: #{dqn_conv_forward.4} parent=11 // pred_fallthru
        _
    $region12: #{dqn_conv_forward.4} parent=5 // pred_fallthru
      _
    %p124 = scmp.lt.s32.totalorder %s9, 2
    // Predicated region
    $region21: #{dqn_conv_forward.4} parent=5 // pred_check
      %p125 = pneg %p124
    $region22: #{dqn_conv_forward.4} parent=5 // pred_check_branch
      %127 = sbr.rel (%p125) target = $region24
    $region23: #{dqn_conv_forward.4} parent=5 // pred_region
      // Predicated region
      $region25: #{dqn_conv_forward.4} parent=23 // pred_check
        %p128 = pneg %p29
      $region26: #{dqn_conv_forward.4} parent=23 // pred_check_branch
        %130 = sbr.rel (%p128) target = $region28
      $region27: #{dqn_conv_forward.4} parent=23 // pred_region
        %s131 = smul.u32 8, %s9
        %p132 = scmp.lt.s32.totalorder %s131, 15
        %s133 = scalar_select %p132, %s131, 15
        %s134 = smul.addr %s133, 2
        %s135 = smul.addr %s134, 4
        %s136 = scalar_lea.vmem %s0, %s135
        %s137 = smul.u32 8, %s9
      $region28: #{dqn_conv_forward.4} parent=23 // pred_fallthru
        _
    $region24: #{dqn_conv_forward.4} parent=5 // pred_fallthru
      _
    %p138 = scmp.le.s32.totalorder 1, %s9
    %p139 = scmp.lt.s32.totalorder %s9, 3
    %p140 = pnand %p138, %p139
    %p141 = pneg %p140
    // Predicated region
    $region29: #{dqn_conv_forward.4} parent=5 // pred_check
      _
    $region30: #{dqn_conv_forward.4} parent=5 // pred_check_branch
      %143 = sbr.rel (%p140) target = $region32
    $region31: #{dqn_conv_forward.4} parent=5 // pred_region
      %s144 = ssub.s32 %s9, 1
      %s145 = smul.u32 8, %s14
      %p146 = scmp.lt.s32.totalorder %s145, 15
      %s147 = scalar_select %p146, %s145, 15
      %s148 = smul.addr %s147, 2
      %s149 = smul.addr %s148, 4
      %s150 = scalar_lea.vmem %s0, %s149
      %p151 = pneg %p35
      %p152 = pneg %p32
      %p153 = pneg %p56
      %p154 = pneg %p53
      %p155 = pneg %p77
      %p156 = pneg %p74
      %p157 = pneg %p103
      %p158 = pneg %p100
      %s159 = smul.u32 8, %s14
      %p160 = scmp.lt.s32.totalorder %s159, 15
      %s161 = scalar_select %p160, %s159, 15
      %s162 = smul.addr %s161, 4
      %s163 = scalar_lea.vmem %s3, %s162
      %s164 = smul.u32 8, %s14
      %p165 = scmp.lt.s32.totalorder %s164, 15
      %s166 = scalar_select %p165, %s164, 15
      %s167 = smul.addr %s166, 2
      %s168 = smul.addr %s167, 4
      %s169 = scalar_lea.vmem %s0, %s168
      %s170 = smul.u32 8, %s14
      %s171 = smul.u32 8, %s14
      %p172 = scmp.lt.s32.totalorder %s171, 15
      %s173 = scalar_select %p172, %s171, 15
      %s174 = smul.addr %s173, 4
      %s175 = scalar_lea.vmem %s3, %s174
      %s176 = smul.u32 8, %s14
      %v178 = vld [vmem:[%s169] sm:$0xff]
      %v179 = vld [vmem:[%s169 + $0x8] sm:$0xff]
      %v180 = vld [vmem:[%s169 + $0x10] sm:$0xff]
      %v181 = vld [vmem:[%s169 + $0x18] sm:$0xff]
      %v182 = vld [vmem:[%s169 + $0x20] sm:$0xff]
      %v183 = vld [vmem:[%s169 + $0x28] sm:$0xff]
      %v184 = vld [vmem:[%s169 + $0x30] sm:$0xff]
      %v185 = vld [vmem:[%s169 + $0x38] sm:$0xff]
      %v186 = vld [vmem:[%s1] sm:$0xf]
      %v187 = vld [vmem:[%s1 + $0x4] sm:$0xf]
      %v188 = vld [vmem:[%s1 + $0x8] sm:$0xf]
      %v189 = vld [vmem:[%s1 + $0xc] sm:$0xf]
      %v190 = vld [vmem:[%s1 + $0x10] sm:$0xf]
      %v191 = vld [vmem:[%s1 + $0x14] sm:$0xf]
      %v192 = vld [vmem:[%s1 + $0x18] sm:$0xf]
      %v193 = vld [vmem:[%s1 + $0x1c] sm:$0xf]
      %v194 = vld [vmem:[%s1 + $0x20] sm:$0xf]
      %v195 = vld [vmem:[%s1 + $0x24] sm:$0xf]
      %v196 = vld [vmem:[%s1 + $0x28] sm:$0xf]
      %v197 = vld [vmem:[%s1 + $0x2c] sm:$0xf]
      %v198 = vld [vmem:[%s1 + $0x30] sm:$0xf]
      %v199 = vld [vmem:[%s1 + $0x34] sm:$0xf]
      %v200 = vld [vmem:[%s1 + $0x38] sm:$0xf]
      %v201 = vld [vmem:[%s1 + $0x3c] sm:$0xf]
      %v202 = vld [vmem:[%s1 + $0x40] sm:$0xf]
      %v203 = vld [vmem:[%s1 + $0x44] sm:$0xf]
      %v204 = vld [vmem:[%s1 + $0x48] sm:$0xf]
      %v205 = vld [vmem:[%s1 + $0x4c] sm:$0xf]
      %v206 = vld [vmem:[%s1 + $0x50] sm:$0xf]
      %v207 = vld [vmem:[%s1 + $0x54] sm:$0xf]
      %v208 = vld [vmem:[%s1 + $0x58] sm:$0xf]
      %v209 = vld [vmem:[%s1 + $0x5c] sm:$0xf]
      %v210 = vld [vmem:[%s1 + $0x60] sm:$0xf]
      %v211 = vld [vmem:[%s1 + $0x64] sm:$0xf]
      %v212 = vld [vmem:[%s1 + $0x68] sm:$0xf]
      %v213 = vld [vmem:[%s1 + $0x6c] sm:$0xf]
      %v214 = vld [vmem:[%s1 + $0x70] sm:$0xf]
      %v215 = vld [vmem:[%s1 + $0x74] sm:$0xf]
      %v216 = vld [vmem:[%s1 + $0x78] sm:$0xf]
      %v217 = vld [vmem:[%s1 + $0x7c] sm:$0xf]
      %v218 = vld [vmem:[%s2] sm:$0x1]
      %v220 = vlaneseq
      %v221 = vshrl.u32 %v220, 7
      %v222 = vsub.s32 0, %v221
      %v223 = vrot.slane %v218, %v222
      %v233 = vunpack.c.l.b16 %v178
      %v234 = vunpack.c.h.b16 %v178
      %v235 = vunpack.c.l.b16 %v179
      %v236 = vunpack.c.h.b16 %v179
      %v237 = vunpack.c.l.b16 %v180
      %v238 = vunpack.c.h.b16 %v180
      %v239 = vunpack.c.l.b16 %v181
      %v240 = vunpack.c.h.b16 %v181
      %v241 = vunpack.c.l.b16 %v182
      %v242 = vunpack.c.h.b16 %v182
      %v243 = vunpack.c.l.b16 %v183
      %v244 = vunpack.c.h.b16 %v183
      %v245 = vunpack.c.l.b16 %v184
      %v246 = vunpack.c.h.b16 %v184
      %v247 = vunpack.c.l.b16 %v185
      %v248 = vunpack.c.h.b16 %v185
      %v249 = vpack.c.b16 %v235, %v233
      %v250 = vpack.c.b16 %v236, %v234
      %v251 = vpack.c.b16 %v239, %v237
      %v252 = vpack.c.b16 %v240, %v238
      %v253 = vpack.c.b16 %v243, %v241
      %v254 = vpack.c.b16 %v244, %v242
      %v255 = vpack.c.b16 %v247, %v245
      %v256 = vpack.c.b16 %v248, %v246
      %v297 = vunpack.c.l.b16 %v186
      %v298 = vunpack.c.l.b16 %v187
      %v299 = vunpack.c.l.b16 %v188
      %v300 = vunpack.c.l.b16 %v189
      %v301 = vunpack.c.l.b16 %v190
      %v302 = vunpack.c.l.b16 %v191
      %v303 = vunpack.c.l.b16 %v192
      %v304 = vunpack.c.l.b16 %v193
      %v305 = vunpack.c.l.b16 %v194
      %v306 = vunpack.c.l.b16 %v195
      %v307 = vunpack.c.l.b16 %v196
      %v308 = vunpack.c.l.b16 %v197
      %v309 = vunpack.c.l.b16 %v198
      %v310 = vunpack.c.l.b16 %v199
      %v311 = vunpack.c.l.b16 %v200
      %v312 = vunpack.c.l.b16 %v201
      %v313 = vunpack.c.l.b16 %v202
      %v314 = vunpack.c.l.b16 %v203
      %v315 = vunpack.c.l.b16 %v204
      %v316 = vunpack.c.l.b16 %v205
      %v317 = vunpack.c.l.b16 %v206
      %v318 = vunpack.c.l.b16 %v207
      %v319 = vunpack.c.l.b16 %v208
      %v320 = vunpack.c.l.b16 %v209
      %v321 = vunpack.c.l.b16 %v210
      %v322 = vunpack.c.l.b16 %v211
      %v323 = vunpack.c.l.b16 %v212
      %v324 = vunpack.c.l.b16 %v213
      %v325 = vunpack.c.l.b16 %v214
      %v326 = vunpack.c.l.b16 %v215
      %v327 = vunpack.c.l.b16 %v216
      %v328 = vunpack.c.l.b16 %v217
      %v329 = vpack.c.b16 %v298, %v297
      %v330 = vpack.c.b16 %v300, %v299
      %v331 = vpack.c.b16 %v302, %v301
      %v332 = vpack.c.b16 %v304, %v303
      %v333 = vpack.c.b16 %v306, %v305
      %v334 = vpack.c.b16 %v308, %v307
      %v335 = vpack.c.b16 %v310, %v309
      %v336 = vpack.c.b16 %v312, %v311
      %v337 = vpack.c.b16 %v314, %v313
      %v338 = vpack.c.b16 %v316, %v315
      %v339 = vpack.c.b16 %v318, %v317
      %v340 = vpack.c.b16 %v320, %v319
      %v341 = vpack.c.b16 %v322, %v321
      %v342 = vpack.c.b16 %v324, %v323
      %v343 = vpack.c.b16 %v326, %v325
      %v344 = vpack.c.b16 %v328, %v327
      %361 = vmatprep.subr.bf16.mxu0 0
      %362 = vmatpush1.bf16.msra.mxu0 %v329
      %363 = vmatprep.subr.bf16.mxu0 0
      %364 = vmatpush1.bf16.msra.mxu0 %v330
      %365 = vmatprep.subr.bf16.mxu0 0
      %366 = vmatpush1.bf16.msra.mxu0 %v331
      %367 = vmatprep.subr.bf16.mxu0 0
      %368 = vmatpush1.bf16.msra.mxu0 %v332
      %369 = vmatprep.subr.bf16.mxu0 0
      %370 = vmatpush1.bf16.msra.mxu0 %v333
      %371 = vmatprep.subr.bf16.mxu0 0
      %372 = vmatpush1.bf16.msra.mxu0 %v334
      %373 = vmatprep.subr.bf16.mxu0 0
      %374 = vmatpush1.bf16.msra.mxu0 %v335
      %375 = vmatprep.subr.bf16.mxu0 0
      %376 = vmatpush1.bf16.msra.mxu0 %v336
      %377 = vmatprep.subr.bf16.mxu0 0
      %378 = vmatpush1.bf16.msra.mxu0 %v337
      %379 = vmatprep.subr.bf16.mxu0 0
      %380 = vmatpush1.bf16.msra.mxu0 %v338
      %381 = vmatprep.subr.bf16.mxu0 0
      %382 = vmatpush1.bf16.msra.mxu0 %v339
      %383 = vmatprep.subr.bf16.mxu0 0
      %384 = vmatpush1.bf16.msra.mxu0 %v340
      %385 = vmatprep.subr.bf16.mxu0 0
      %386 = vmatpush1.bf16.msra.mxu0 %v341
      %387 = vmatprep.subr.bf16.mxu0 0
      %388 = vmatpush1.bf16.msra.mxu0 %v342
      %389 = vmatprep.subr.bf16.mxu0 0
      %390 = vmatpush1.bf16.msra.mxu0 %v343
      %391 = vmatprep.subr.bf16.mxu0 0
      %392 = vmatpush1.bf16.msra.mxu0 %v344
      %393 = vmatprep.mubr.bf16.mxu0 %v250
      %394 = vmatmul.mubr.bf16.gmra.mrb[0].mxu0 %v249
      %v395 = vpop.f32.mrb[0].mxu0
      %v396 = vadd.f32 %v223, %v395
      %v397 = vpop.f32.mrb[0].mxu0
      %v398 = vpop.f32.mrb[0].mxu0
      %v399 = vadd.f32 %v223, %v398
      %v400 = vpop.f32.mrb[0].mxu0
      %401 = vmatprep.mubr.bf16.mxu0 %v252
      %402 = vmatmul.mubr.bf16.gmra.mrb[0].mxu0 %v251
      %v403 = vpop.f32.mrb[0].mxu0
      %v404 = vadd.f32 %v223, %v403
      %v405 = vpop.f32.mrb[0].mxu0
      %v406 = vpop.f32.mrb[0].mxu0
      %v407 = vadd.f32 %v223, %v406
      %v408 = vpop.f32.mrb[0].mxu0
      %409 = vmatprep.mubr.bf16.mxu0 %v254
      %410 = vmatmul.mubr.bf16.gmra.mrb[0].mxu0 %v253
      %v411 = vpop.f32.mrb[0].mxu0
      %v412 = vadd.f32 %v223, %v411
      %v413 = vpop.f32.mrb[0].mxu0
      %v414 = vpop.f32.mrb[0].mxu0
      %v415 = vadd.f32 %v223, %v414
      %v416 = vpop.f32.mrb[0].mxu0
      %417 = vmatprep.mubr.bf16.mxu0 %v256
      %418 = vmatmul.mubr.bf16.gmra.mrb[0].mxu0 %v255
      %v419 = vpop.f32.mrb[0].mxu0
      %v420 = vadd.f32 %v223, %v419
      %v421 = vpop.f32.mrb[0].mxu0
      %v422 = vpop.f32.mrb[0].mxu0
      %v423 = vadd.f32 %v223, %v422
      %v424 = vpop.f32.mrb[0].mxu0
      %425 = vdwg.mxu0
      %v426 = vmax.f32 %v396, 0.0
      %v427 = vmax.f32 %v399, 0.0
      %v428 = vmax.f32 %v404, 0.0
      %v429 = vmax.f32 %v407, 0.0
      %v430 = vmax.f32 %v412, 0.0
      %v431 = vmax.f32 %v415, 0.0
      %v432 = vmax.f32 %v420, 0.0
      %v433 = vmax.f32 %v423, 0.0
      %v434 = vpack.c.bf16 %v427, %v426
      %v435 = vpack.c.bf16 %v429, %v428
      %v436 = vpack.c.bf16 %v431, %v430
      %v437 = vpack.c.bf16 %v433, %v432
      %v442 = vunpack.c.l.b16 %v434
      %v443 = vunpack.c.h.b16 %v434
      %v444 = vunpack.c.l.b16 %v435
      %v445 = vunpack.c.h.b16 %v435
      %v446 = vunpack.c.l.b16 %v436
      %v447 = vunpack.c.h.b16 %v436
      %v448 = vunpack.c.l.b16 %v437
      %v449 = vunpack.c.h.b16 %v437
      %v450 = vpack.c.b16 %v442, %v442
      %v451 = vpack.c.b16 %v443, %v443
      %v452 = vpack.c.b16 %v444, %v444
      %v453 = vpack.c.b16 %v445, %v445
      %v454 = vpack.c.b16 %v446, %v446
      %v455 = vpack.c.b16 %v447, %v447
      %v456 = vpack.c.b16 %v448, %v448
      %v457 = vpack.c.b16 %v449, %v449
      %vm466 = vcmask 257024
      %467 = vst.msk [vmem:[%s175] sm:$0xf] %vm466, %v450
      %468 = vst.msk [vmem:[%s175 + $0x4] sm:$0xf] %vm466, %v451
      %469 = vst.msk [vmem:[%s175 + $0x8] sm:$0xf] %vm466, %v452
      %470 = vst.msk [vmem:[%s175 + $0xc] sm:$0xf] %vm466, %v453
      %471 = vst.msk [vmem:[%s175 + $0x10] sm:$0xf] %vm466, %v454
      %472 = vst.msk [vmem:[%s175 + $0x14] sm:$0xf] %vm466, %v455
      %473 = vst.msk [vmem:[%s175 + $0x18] sm:$0xf] %vm466, %v456
      %474 = vst.msk [vmem:[%s175 + $0x1c] sm:$0xf] %vm466, %v457
      %s475 = smul.u32 8, %s14
      %p476 = scmp.lt.s32.totalorder %s475, 15
      %s477 = scalar_select %p476, %s475, 15
      %s478 = smul.addr %s477, 4
      %s479 = scalar_lea.vmem %s3, %s478
      // Predicated region
      $region33: #{dqn_conv_forward.4} parent=31 // pred_check
        %p480 = pneg %p100
      $region34: #{dqn_conv_forward.4} parent=31 // pred_check_branch
        %482 = sbr.rel (%p480) target = $region36
      $region35: #{dqn_conv_forward.4} parent=31 // pred_region
        %s483 = smul.u32 8, %s14
      $region36: #{dqn_conv_forward.4} parent=31 // pred_fallthru
        _
    $region32: #{dqn_conv_forward.4} parent=5 // pred_fallthru
      _
    %p484 = scmp.le.s32.totalorder 2, %s9
    // Predicated region
    $region37: #{dqn_conv_forward.4} parent=5 // pred_check
      %p485 = pneg %p484
    $region38: #{dqn_conv_forward.4} parent=5 // pred_check_branch
      %487 = sbr.rel (%p485) target = $region40
    $region39: #{dqn_conv_forward.4} parent=5 // pred_region
      %s488 = ssub.s32 %s9, 2
      // Predicated region
      $region41: #{dqn_conv_forward.4} parent=39 // pred_check
        %p489 = pneg %p106
      $region42: #{dqn_conv_forward.4} parent=39 // pred_check_branch
        %491 = sbr.rel (%p489) target = $region44
      $region43: #{dqn_conv_forward.4} parent=39 // pred_region
        %s492 = smul.u32 8, %s15
        %p493 = scmp.lt.s32.totalorder %s492, 15
        %s494 = scalar_select %p493, %s492, 15
        %s495 = smul.addr %s494, 4
        %s496 = scalar_lea.vmem %s3, %s495
      $region44: #{dqn_conv_forward.4} parent=39 // pred_fallthru
        _
    $region40: #{dqn_conv_forward.4} parent=5 // pred_fallthru
      _
  $region6: #{dqn_conv_forward.4} parent=0 // loop_footer
    %s13 = sadd.s32 1, %s9
  $region7: #{dqn_conv_forward.4} parent=0 // loop_footer_branch
    %8 = sbr.rel target = $region3
  $region8: #{dqn_conv_forward.4} parent=0 // loop_exit
    _

// kernel: dqn_conv_forward.5
$region0: #{dqn_conv_forward.5}
  #allocation0 [shape = 'u32[]', space=smem, size = 0x4, offset = 0x4, fixed_abs, tag = 'smem constant byte address 0x4 - core index']
  #allocation1 [shape = 'u32[144,128]{1,0:T(1,128)}', space=vmem, size = 0x12000, scoped, tag = 'internal scratch']
  %s0 = inlined_call_operand.vmem [shape: bf16[32,512], index: 0, kind: input, shape index: {}]
  %s1 = inlined_call_operand.vmem [shape: bf16[512,64], index: 1, kind: input, shape index: {}]
  %s2 = inlined_call_operand.vmem [shape: f32[1,64], index: 2, kind: input, shape index: {}]
  %s3 = inlined_call_operand.vmem [shape: bf16[32,64], index: 3, kind: output, shape index: {}]
  %s4 = sld [smem:[#allocation0]]
  $region45: #{dqn_conv_forward.5} parent=0
    _
  %s6 = ssub.s32 1, %s4
  %s7 = scalar_select 0, %s6, %s4
  loop: start=0, step=1, limit=4
  $region2: #{dqn_conv_forward.5} parent=0 // loop_pre_header
    _
  $region3: #{dqn_conv_forward.5} parent=0 // loop_header
    %s9 = sphi 0, %s13
    %p10 = scmp.ge.s32.totalorder %s9, 4
    %s19 = sphi 0, %s21
    %s22 = sphi 0, %s19
    %s23 = sphi 0, %s22
    %s39 = sphi 0, %s23
    %s43 = sphi 0, %s43
    %s45 = sphi 0, %s43
    %s46 = sphi 0, %s45
    %s60 = sphi 0, %s46
    %s64 = sphi 0, %s64
    %s66 = sphi 0, %s64
    %s67 = sphi 0, %s66
    %s81 = sphi 0, %s67
    %s87 = sphi 0, %s89
    %s90 = sphi 0, %s87
    %s91 = sphi 0, %s90
    %s107 = sphi 0, %s91
  $region4: #{dqn_conv_forward.5} parent=0 // loop_header_branch
    %12 = sbr.rel (%p10) target = $region8
  $region5: #{dqn_conv_forward.5} parent=0 // loop_body
    %s14 = ssub.s32 %s9, 1
    %s15 = ssub.s32 %s9, 2
    %s16 = sadd.s32 %s9, 1
    %s17 = ssub.s32 %s9, %s16
    %p18 = scmp.eq.s32.totalorder %s17, 0
    %s20 = sadd.s32 %s19, 1
    %s21 = scalar_select %p18, %s19, %s20
    %p24 = pneg %p18
    %p25 = scmp.eq.s32.totalorder %s9, 1
    %p26 = por %p24, %p25
    %p27 = scmp.ne.s32.totalorder %s19, %s22
    %p28 = scmp.eq.s32.totalorder %s9, 0
    %p29 = por %p27, %p28
    %p30 = scmp.ne.s32.totalorder %s19, %s22
    %p31 = scmp.eq.s32.totalorder %s14, 1
    %p32 = por %p30, %p31
    %p33 = scmp.ne.s32.totalorder %s22, %s23
    %p34 = scmp.eq.s32.totalorder %s14, 0
    %p35 = por %p33, %p34
    %p36 = scmp.ne.s32.totalorder %s22, %s23
    %p37 = scmp.eq.s32.totalorder %s15, 1
    %p38 = por %p36, %p37
    %p40 = scmp.ne.s32.totalorder %s23, %s39
    %p41 = scmp.eq.s32.totalorder %s15, 0
    %p42 = por %p40, %p41
    %s44 = sadd.s32 %s43, 1
    %p47 = scmp.eq.s32.totalorder %s9, 1
    %p48 = scmp.ne.s32.totalorder %s43, %s45
    %p49 = scmp.eq.s32.totalorder %s9, 0
    %p50 = por %p48, %p49
    %p51 = scmp.ne.s32.totalorder %s43, %s45
    %p52 = scmp.eq.s32.totalorder %s14, 1
    %p53 = por %p51, %p52
    %p54 = scmp.ne.s32.totalorder %s45, %s46
    %p55 = scmp.eq.s32.totalorder %s14, 0
    %p56 = por %p54, %p55
    %p57 = scmp.ne.s32.totalorder %s45, %s46
    %p58 = scmp.eq.s32.totalorder %s15, 1
    %p59 = por %p57, %p58
    %p61 = scmp.ne.s32.totalorder %s46, %s60
    %p62 = scmp.eq.s32.totalorder %s15, 0
    %p63 = por %p61, %p62
    %s65 = sadd.s32 %s64, 1
    %p68 = scmp.eq.s32.totalorder %s9, 1
    %p69 = scmp.ne.s32.totalorder %s64, %s66
    %p70 = scmp.eq.s32.totalorder %s9, 0
    %p71 = por %p69, %p70
    %p72 = scmp.ne.s32.totalorder %s64, %s66
    %p73 = scmp.eq.s32.totalorder %s14, 1
    %p74 = por %p72, %p73
    %p75 = scmp.ne.s32.totalorder %s66, %s67
    %p76 = scmp.eq.s32.totalorder %s14, 0
    %p77 = por %p75, %p76
    %p78 = scmp.ne.s32.totalorder %s66, %s67
    %p79 = scmp.eq.s32.totalorder %s15, 1
    %p80 = por %p78, %p79
    %p82 = scmp.ne.s32.totalorder %s67, %s81
    %p83 = scmp.eq.s32.totalorder %s15, 0
    %p84 = por %p82, %p83
    %s85 = ssub.s32 %s9, %s16
    %p86 = scmp.eq.s32.totalorder %s85, 0
    %s88 = sadd.s32 %s87, 1
    %s89 = scalar_select %p86, %s87, %s88
    %p92 = pneg %p86
    %p93 = scmp.eq.s32.totalorder %s9, 1
    %p94 = por %p92, %p93
    %p95 = scmp.ne.s32.totalorder %s87, %s90
    %p96 = scmp.eq.s32.totalorder %s9, 0
    %p97 = por %p95, %p96
    %p98 = scmp.ne.s32.totalorder %s87, %s90
    %p99 = scmp.eq.s32.totalorder %s14, 1
    %p100 = por %p98, %p99
    %p101 = scmp.ne.s32.totalorder %s90, %s91
    %p102 = scmp.eq.s32.totalorder %s14, 0
    %p103 = por %p101, %p102
    %p104 = scmp.ne.s32.totalorder %s90, %s91
    %p105 = scmp.eq.s32.totalorder %s15, 1
    %p106 = por %p104, %p105
    %p108 = scmp.ne.s32.totalorder %s91, %s107
    %p109 = scmp.eq.s32.totalorder %s15, 0
    %p110 = por %p108, %p109
    %p111 = scmp.le.s32.totalorder 1, %s9
    %p112 = scmp.lt.s32.totalorder %s9, 3
    %p113 = pnand %p111, %p112
    %p114 = pneg %p113
    // Predicated region
    $region9: #{dqn_conv_forward.5} parent=5 // pred_check
      _
    $region10: #{dqn_conv_forward.5} parent=5 // pred_check_branch
      %116 = sbr.rel (%p113) target = $region12
    $region11: #{dqn_conv_forward.5} parent=5 // pred_region
      %s117 = ssub.s32 %s9, 1
      // Predicated region
      $region13: #{dqn_conv_forward.5} parent=11 // pred_check
        %p118 = pneg %p56
      $region14: #{dqn_conv_forward.5} parent=11 // pred_check_branch
        %120 = sbr.rel (%p118) target = $region16
      $region15: #{dqn_conv_forward.5} parent=11 // pred_region
        _
      $region16: #{dqn_conv_forward.5} parent=11 // pred_fallthru
        _
      // Predicated region
      $region17: #{dqn_conv_forward.5} parent=11 // pred_check
        %p121 = pneg %p77
      $region18: #{dqn_conv_forward.5} parent=11 // pred_check_branch
        %123 = sbr.rel (%p121) target = $region20
      $region19: #{dqn_conv_forward.5} parent=11 // pred_region
        _
      $region20: #{dqn_conv_forward.5} parent=11 // pred_fallthru
        _
    $region12: #{dqn_conv_forward.5} parent=5 // pred_fallthru
      _
    %p124 = scmp.lt.s32.totalorder %s9, 2
    // Predicated region
    $region21: #{dqn_conv_forward.5} parent=5 // pred_check
      %p125 = pneg %p124
    $region22: #{dqn_conv_forward.5} parent=5 // pred_check_branch
      %127 = sbr.rel (%p125) target = $region24
    $region23: #{dqn_conv_forward.5} parent=5 // pred_region
      // Predicated region
      $region25: #{dqn_conv_forward.5} parent=23 // pred_check
        %p128 = pneg %p29
      $region26: #{dqn_conv_forward.5} parent=23 // pred_check_branch
        %130 = sbr.rel (%p128) target = $region28
      $region27: #{dqn_conv_forward.5} parent=23 // pred_region
        %s131 = smul.u32 2, %s9
        %p132 = scmp.lt.s32.totalorder %s131, 3
        %s133 = scalar_select %p132, %s131, 3
        %s134 = smul.addr %s133, 4
        %s135 = smul.addr %s134, 4
        %s136 = scalar_lea.vmem %s0, %s135
        %s137 = smul.u32 2, %s9
      $region28: #{dqn_conv_forward.5} parent=23 // pred_fallthru
        _
    $region24: #{dqn_conv_forward.5} parent=5 // pred_fallthru
      _
    %p138 = scmp.le.s32.totalorder 1, %s9
    %p139 = scmp.lt.s32.totalorder %s9, 3
    %p140 = pnand %p138, %p139
    %p141 = pneg %p140
    // Predicated region
    $region29: #{dqn_conv_forward.5} parent=5 // pred_check
      _
    $region30: #{dqn_conv_forward.5} parent=5 // pred_check_branch
      %143 = sbr.rel (%p140) target = $region32
    $region31: #{dqn_conv_forward.5} parent=5 // pred_region
      %s144 = ssub.s32 %s9, 1
      %s145 = smul.u32 2, %s14
      %p146 = scmp.lt.s32.totalorder %s145, 3
      %s147 = scalar_select %p146, %s145, 3
      %s148 = smul.addr %s147, 4
      %s149 = smul.addr %s148, 4
      %s150 = scalar_lea.vmem %s0, %s149
      %p151 = pneg %p35
      %p152 = pneg %p32
      %p153 = pneg %p56
      %p154 = pneg %p53
      %p155 = pneg %p77
      %p156 = pneg %p74
      %p157 = pneg %p103
      %p158 = pneg %p100
      %s159 = smul.u32 2, %s14
      %p160 = scmp.lt.s32.totalorder %s159, 3
      %s161 = scalar_select %p160, %s159, 3
      %s162 = smul.addr %s161, 4
      %s163 = scalar_lea.vmem %s3, %s162
      %s164 = smul.u32 2, %s14
      %p165 = scmp.lt.s32.totalorder %s164, 3
      %s166 = scalar_select %p165, %s164, 3
      %s167 = smul.addr %s166, 4
      %s168 = smul.addr %s167, 4
      %s169 = scalar_lea.vmem %s0, %s168
      %s170 = smul.u32 2, %s14
      %s171 = smul.u32 2, %s14
      %p172 = scmp.lt.s32.totalorder %s171, 3
      %s173 = scalar_select %p172, %s171, 3
      %s174 = smul.addr %s173, 4
      %s175 = scalar_lea.vmem %s3, %s174
      %s176 = smul.u32 2, %s14
      %v178 = vld [vmem:[%s169] sm:$0xff]
      %v179 = vld [vmem:[%s169 + $0x8] sm:$0xff]
      %v180 = vld [vmem:[%s169 + $0x10] sm:$0xff]
      %v181 = vld [vmem:[%s169 + $0x18] sm:$0xff]
      %v182 = vld [vmem:[%s1] sm:$0xf]
      %v183 = vld [vmem:[%s1 + $0x4] sm:$0xf]
      %v184 = vld [vmem:[%s1 + $0x8] sm:$0xf]
      %v185 = vld [vmem:[%s1 + $0xc] sm:$0xf]
      %v186 = vld [vmem:[%s1 + $0x10] sm:$0xf]
      %v187 = vld [vmem:[%s1 + $0x14] sm:$0xf]
      %v188 = vld [vmem:[%s1 + $0x18] sm:$0xf]
      %v189 = vld [vmem:[%s1 + $0x1c] sm:$0xf]
      %v190 = vld [vmem:[%s1 + $0x20] sm:$0xf]
      %v191 = vld [vmem:[%s1 + $0x24] sm:$0xf]
      %v192 = vld [vmem:[%s1 + $0x28] sm:$0xf]
      %v193 = vld [vmem:[%s1 + $0x2c] sm:$0xf]
      %v194 = vld [vmem:[%s1 + $0x30] sm:$0xf]
      %v195 = vld [vmem:[%s1 + $0x34] sm:$0xf]
      %v196 = vld [vmem:[%s1 + $0x38] sm:$0xf]
      %v197 = vld [vmem:[%s1 + $0x3c] sm:$0xf]
      %v198 = vld [vmem:[%s1 + $0x40] sm:$0xf]
      %v199 = vld [vmem:[%s1 + $0x44] sm:$0xf]
      %v200 = vld [vmem:[%s1 + $0x48] sm:$0xf]
      %v201 = vld [vmem:[%s1 + $0x4c] sm:$0xf]
      %v202 = vld [vmem:[%s1 + $0x50] sm:$0xf]
      %v203 = vld [vmem:[%s1 + $0x54] sm:$0xf]
      %v204 = vld [vmem:[%s1 + $0x58] sm:$0xf]
      %v205 = vld [vmem:[%s1 + $0x5c] sm:$0xf]
      %v206 = vld [vmem:[%s1 + $0x60] sm:$0xf]
      %v207 = vld [vmem:[%s1 + $0x64] sm:$0xf]
      %v208 = vld [vmem:[%s1 + $0x68] sm:$0xf]
      %v209 = vld [vmem:[%s1 + $0x6c] sm:$0xf]
      %v210 = vld [vmem:[%s1 + $0x70] sm:$0xf]
      %v211 = vld [vmem:[%s1 + $0x74] sm:$0xf]
      %v212 = vld [vmem:[%s1 + $0x78] sm:$0xf]
      %v213 = vld [vmem:[%s1 + $0x7c] sm:$0xf]
      %v214 = vld [vmem:[%s1 + $0x80] sm:$0xf]
      %v215 = vld [vmem:[%s1 + $0x84] sm:$0xf]
      %v216 = vld [vmem:[%s1 + $0x88] sm:$0xf]
      %v217 = vld [vmem:[%s1 + $0x8c] sm:$0xf]
      %v218 = vld [vmem:[%s1 + $0x90] sm:$0xf]
      %v219 = vld [vmem:[%s1 + $0x94] sm:$0xf]
      %v220 = vld [vmem:[%s1 + $0x98] sm:$0xf]
      %v221 = vld [vmem:[%s1 + $0x9c] sm:$0xf]
      %v222 = vld [vmem:[%s1 + $0xa0] sm:$0xf]
      %v223 = vld [vmem:[%s1 + $0xa4] sm:$0xf]
      %v224 = vld [vmem:[%s1 + $0xa8] sm:$0xf]
      %v225 = vld [vmem:[%s1 + $0xac] sm:$0xf]
      %v226 = vld [vmem:[%s1 + $0xb0] sm:$0xf]
      %v227 = vld [vmem:[%s1 + $0xb4] sm:$0xf]
      %v228 = vld [vmem:[%s1 + $0xb8] sm:$0xf]
      %v229 = vld [vmem:[%s1 + $0xbc] sm:$0xf]
      %v230 = vld [vmem:[%s1 + $0xc0] sm:$0xf]
      %v231 = vld [vmem:[%s1 + $0xc4] sm:$0xf]
      %v232 = vld [vmem:[%s1 + $0xc8] sm:$0xf]
      %v233 = vld [vmem:[%s1 + $0xcc] sm:$0xf]
      %v234 = vld [vmem:[%s1 + $0xd0] sm:$0xf]
      %v235 = vld [vmem:[%s1 + $0xd4] sm:$0xf]
      %v236 = vld [vmem:[%s1 + $0xd8] sm:$0xf]
      %v237 = vld [vmem:[%s1 + $0xdc] sm:$0xf]
      %v238 = vld [vmem:[%s1 + $0xe0] sm:$0xf]
      %v239 = vld [vmem:[%s1 + $0xe4] sm:$0xf]
      %v240 = vld [vmem:[%s1 + $0xe8] sm:$0xf]
      %v241 = vld [vmem:[%s1 + $0xec] sm:$0xf]
      %v242 = vld [vmem:[%s1 + $0xf0] sm:$0xf]
      %v243 = vld [vmem:[%s1 + $0xf4] sm:$0xf]
      %v244 = vld [vmem:[%s1 + $0xf8] sm:$0xf]
      %v245 = vld [vmem:[%s1 + $0xfc] sm:$0xf]
      %v246 = vld [vmem:[%s2] sm:$0x1]
      %v248 = vlaneseq
      %v249 = vshrl.u32 %v248, 7
      %v250 = vsub.s32 0, %v249
      %v251 = vrot.slane %v246, %v250
      %v257 = vunpack.c.l.b16 %v178
      %v258 = vunpack.c.h.b16 %v178
      %v259 = vunpack.c.l.b16 %v179
      %v260 = vunpack.c.h.b16 %v179
      %v261 = vunpack.c.l.b16 %v180
      %v262 = vunpack.c.h.b16 %v180
      %v263 = vunpack.c.l.b16 %v181
      %v264 = vunpack.c.h.b16 %v181
      %v265 = vpack.c.b16 %v261, %v257
      %v266 = vpack.c.b16 %v262, %v258
      %v267 = vpack.c.b16 %v263, %v259
      %v268 = vpack.c.b16 %v264, %v260
      %v337 = vunpack.c.l.b16 %v182
      %v338 = vunpack.c.l.b16 %v183
      %v339 = vunpack.c.l.b16 %v184
      %v340 = vunpack.c.l.b16 %v185
      %v341 = vunpack.c.l.b16 %v186
      %v342 = vunpack.c.l.b16 %v187
      %v343 = vunpack.c.l.b16 %v188
      %v344 = vunpack.c.l.b16 %v189
      %v345 = vunpack.c.l.b16 %v190
      %v346 = vunpack.c.l.b16 %v191
      %v347 = vunpack.c.l.b16 %v192
      %v348 = vunpack.c.l.b16 %v193
      %v349 = vunpack.c.l.b16 %v194
      %v350 = vunpack.c.l.b16 %v195
      %v351 = vunpack.c.l.b16 %v196
      %v352 = vunpack.c.l.b16 %v197
      %v353 = vunpack.c.l.b16 %v198
      %v354 = vunpack.c.l.b16 %v199
      %v355 = vunpack.c.l.b16 %v200
      %v356 = vunpack.c.l.b16 %v201
      %v357 = vunpack.c.l.b16 %v202
      %v358 = vunpack.c.l.b16 %v203
      %v359 = vunpack.c.l.b16 %v204
      %v360 = vunpack.c.l.b16 %v205
      %v361 = vunpack.c.l.b16 %v206
      %v362 = vunpack.c.l.b16 %v207
      %v363 = vunpack.c.l.b16 %v208
      %v364 = vunpack.c.l.b16 %v209
      %v365 = vunpack.c.l.b16 %v210
      %v366 = vunpack.c.l.b16 %v211
      %v367 = vunpack.c.l.b16 %v212
      %v368 = vunpack.c.l.b16 %v213
      %v369 = vunpack.c.l.b16 %v214
      %v370 = vunpack.c.l.b16 %v215
      %v371 = vunpack.c.l.b16 %v216
      %v372 = vunpack.c.l.b16 %v217
      %v373 = vunpack.c.l.b16 %v218
      %v374 = vunpack.c.l.b16 %v219
      %v375 = vunpack.c.l.b16 %v220
      %v376 = vunpack.c.l.b16 %v221
      %v377 = vunpack.c.l.b16 %v222
      %v378 = vunpack.c.l.b16 %v223
      %v379 = vunpack.c.l.b16 %v224
      %v380 = vunpack.c.l.b16 %v225
      %v381 = vunpack.c.l.b16 %v226
      %v382 = vunpack.c.l.b16 %v227
      %v383 = vunpack.c.l.b16 %v228
      %v384 = vunpack.c.l.b16 %v229
      %v385 = vunpack.c.l.b16 %v230
      %v386 = vunpack.c.l.b16 %v231
      %v387 = vunpack.c.l.b16 %v232
      %v388 = vunpack.c.l.b16 %v233
      %v389 = vunpack.c.l.b16 %v234
      %v390 = vunpack.c.l.b16 %v235
      %v391 = vunpack.c.l.b16 %v236
      %v392 = vunpack.c.l.b16 %v237
      %v393 = vunpack.c.l.b16 %v238
      %v394 = vunpack.c.l.b16 %v239
      %v395 = vunpack.c.l.b16 %v240
      %v396 = vunpack.c.l.b16 %v241
      %v397 = vunpack.c.l.b16 %v242
      %v398 = vunpack.c.l.b16 %v243
      %v399 = vunpack.c.l.b16 %v244
      %v400 = vunpack.c.l.b16 %v245
      %v401 = vpack.c.b16 %v338, %v337
      %v402 = vpack.c.b16 %v340, %v339
      %v403 = vpack.c.b16 %v342, %v341
      %v404 = vpack.c.b16 %v344, %v343
      %v405 = vpack.c.b16 %v346, %v345
      %v406 = vpack.c.b16 %v348, %v347
      %v407 = vpack.c.b16 %v350, %v349
      %v408 = vpack.c.b16 %v352, %v351
      %v409 = vpack.c.b16 %v354, %v353
      %v410 = vpack.c.b16 %v356, %v355
      %v411 = vpack.c.b16 %v358, %v357
      %v412 = vpack.c.b16 %v360, %v359
      %v413 = vpack.c.b16 %v362, %v361
      %v414 = vpack.c.b16 %v364, %v363
      %v415 = vpack.c.b16 %v366, %v365
      %v416 = vpack.c.b16 %v368, %v367
      %v417 = vpack.c.b16 %v370, %v369
      %v418 = vpack.c.b16 %v372, %v371
      %v419 = vpack.c.b16 %v374, %v373
      %v420 = vpack.c.b16 %v376, %v375
      %v421 = vpack.c.b16 %v378, %v377
      %v422 = vpack.c.b16 %v380, %v379
      %v423 = vpack.c.b16 %v382, %v381
      %v424 = vpack.c.b16 %v384, %v383
      %v425 = vpack.c.b16 %v386, %v385
      %v426 = vpack.c.b16 %v388, %v387
      %v427 = vpack.c.b16 %v390, %v389
      %v428 = vpack.c.b16 %v392, %v391
      %v429 = vpack.c.b16 %v394, %v393
      %v430 = vpack.c.b16 %v396, %v395
      %v431 = vpack.c.b16 %v398, %v397
      %v432 = vpack.c.b16 %v400, %v399
      %465 = vmatprep.subr.bf16.mxu0 0
      %466 = vmatpush1.bf16.msra.mxu0 %v401
      %467 = vmatprep.subr.bf16.mxu0 0
      %468 = vmatpush1.bf16.msra.mxu0 %v402
      %469 = vmatprep.subr.bf16.mxu0 0
      %470 = vmatpush1.bf16.msra.mxu0 %v403
      %471 = vmatprep.subr.bf16.mxu0 0
      %472 = vmatpush1.bf16.msra.mxu0 %v404
      %473 = vmatprep.subr.bf16.mxu0 0
      %474 = vmatpush1.bf16.msra.mxu0 %v405
      %475 = vmatprep.subr.bf16.mxu0 0
      %476 = vmatpush1.bf16.msra.mxu0 %v406
      %477 = vmatprep.subr.bf16.mxu0 0
      %478 = vmatpush1.bf16.msra.mxu0 %v407
      %479 = vmatprep.subr.bf16.mxu0 0
      %480 = vmatpush1.bf16.msra.mxu0 %v408
      %481 = vmatprep.subr.bf16.mxu0 0
      %482 = vmatpush1.bf16.msra.mxu0 %v409
      %483 = vmatprep.subr.bf16.mxu0 0
      %484 = vmatpush1.bf16.msra.mxu0 %v410
      %485 = vmatprep.subr.bf16.mxu0 0
      %486 = vmatpush1.bf16.msra.mxu0 %v411
      %487 = vmatprep.subr.bf16.mxu0 0
      %488 = vmatpush1.bf16.msra.mxu0 %v412
      %489 = vmatprep.subr.bf16.mxu0 0
      %490 = vmatpush1.bf16.msra.mxu0 %v413
      %491 = vmatprep.subr.bf16.mxu0 0
      %492 = vmatpush1.bf16.msra.mxu0 %v414
      %493 = vmatprep.subr.bf16.mxu0 0
      %494 = vmatpush1.bf16.msra.mxu0 %v415
      %495 = vmatprep.subr.bf16.mxu0 0
      %496 = vmatpush1.bf16.msra.mxu0 %v416
      %497 = vmatprep.mubr.bf16.mxu0 %v266
      %498 = vmatmul.mubr.bf16.gmra.mrb[0].mxu0 %v265
      %v499 = vpop.f32.mrb[0].mxu0
      %v500 = vadd.f32 %v251, %v499
      %v501 = vpop.f32.mrb[0].mxu0
      %v502 = vpop.f32.mrb[0].mxu0
      %v503 = vadd.f32 %v251, %v502
      %v504 = vpop.f32.mrb[0].mxu0
      %505 = vdwg.mxu0
      %506 = vmatprep.subr.bf16.mxu0 0
      %507 = vmatpush1.bf16.msra.mxu0 %v417
      %508 = vmatprep.subr.bf16.mxu0 0
      %509 = vmatpush1.bf16.msra.mxu0 %v418
      %510 = vmatprep.subr.bf16.mxu0 0
      %511 = vmatpush1.bf16.msra.mxu0 %v419
      %512 = vmatprep.subr.bf16.mxu0 0
      %513 = vmatpush1.bf16.msra.mxu0 %v420
      %514 = vmatprep.subr.bf16.mxu0 0
      %515 = vmatpush1.bf16.msra.mxu0 %v421
      %516 = vmatprep.subr.bf16.mxu0 0
      %517 = vmatpush1.bf16.msra.mxu0 %v422
      %518 = vmatprep.subr.bf16.mxu0 0
      %519 = vmatpush1.bf16.msra.mxu0 %v423
      %520 = vmatprep.subr.bf16.mxu0 0
      %521 = vmatpush1.bf16.msra.mxu0 %v424
      %522 = vmatprep.subr.bf16.mxu0 0
      %523 = vmatpush1.bf16.msra.mxu0 %v425
      %524 = vmatprep.subr.bf16.mxu0 0
      %525 = vmatpush1.bf16.msra.mxu0 %v426
      %526 = vmatprep.subr.bf16.mxu0 0
      %527 = vmatpush1.bf16.msra.mxu0 %v427
      %528 = vmatprep.subr.bf16.mxu0 0
      %529 = vmatpush1.bf16.msra.mxu0 %v428
      %530 = vmatprep.subr.bf16.mxu0 0
      %531 = vmatpush1.bf16.msra.mxu0 %v429
      %532 = vmatprep.subr.bf16.mxu0 0
      %533 = vmatpush1.bf16.msra.mxu0 %v430
      %534 = vmatprep.subr.bf16.mxu0 0
      %535 = vmatpush1.bf16.msra.mxu0 %v431
      %536 = vmatprep.subr.bf16.mxu0 0
      %537 = vmatpush1.bf16.msra.mxu0 %v432
      %538 = vmatprep.mubr.bf16.mxu0 %v268
      %539 = vmatmul.mubr.bf16.gmra.mrb[0].mxu0 %v267
      %v540 = vpop.f32.mrb[0].mxu0
      %v541 = vadd.f32 %v500, %v540
      %v542 = vpop.f32.mrb[0].mxu0
      %v543 = vpop.f32.mrb[0].mxu0
      %v544 = vadd.f32 %v503, %v543
      %v545 = vpop.f32.mrb[0].mxu0
      %546 = vdwg.mxu0
      %v547 = vmax.f32 %v541, 0.0
      %v548 = vmax.f32 %v544, 0.0
      %v549 = vpack.c.bf16 %v548, %v547
      %v551 = vunpack.c.l.b16 %v549
      %v552 = vunpack.c.h.b16 %v549
      %v553 = vpack.c.b16 %v551, %v551
      %v554 = vpack.c.b16 %v552, %v552
      %vm557 = vcmask 519168
      %558 = vst.msk [vmem:[%s175] sm:$0xf] %vm557, %v553
      %559 = vst.msk [vmem:[%s175 + $0x4] sm:$0xf] %vm557, %v554
      %s560 = smul.u32 2, %s14
      %p561 = scmp.lt.s32.totalorder %s560, 3
      %s562 = scalar_select %p561, %s560, 3
      %s563 = smul.addr %s562, 4
      %s564 = scalar_lea.vmem %s3, %s563
      // Predicated region
      $region33: #{dqn_conv_forward.5} parent=31 // pred_check
        %p565 = pneg %p100
      $region34: #{dqn_conv_forward.5} parent=31 // pred_check_branch
        %567 = sbr.rel (%p565) target = $region36
      $region35: #{dqn_conv_forward.5} parent=31 // pred_region
        %s568 = smul.u32 2, %s14
      $region36: #{dqn_conv_forward.5} parent=31 // pred_fallthru
        _
    $region32: #{dqn_conv_forward.5} parent=5 // pred_fallthru
      _
    %p569 = scmp.le.s32.totalorder 2, %s9
    // Predicated region
    $region37: #{dqn_conv_forward.5} parent=5 // pred_check
      %p570 = pneg %p569
    $region38: #{dqn_conv_forward.5} parent=5 // pred_check_branch
      %572 = sbr.rel (%p570) target = $region40
    $region39: #{dqn_conv_forward.5} parent=5 // pred_region
      %s573 = ssub.s32 %s9, 2
      // Predicated region
      $region41: #{dqn_conv_forward.5} parent=39 // pred_check
        %p574 = pneg %p106
      $region42: #{dqn_conv_forward.5} parent=39 // pred_check_branch
        %576 = sbr.rel (%p574) target = $region44
      $region43: #{dqn_conv_forward.5} parent=39 // pred_region
        %s577 = smul.u32 2, %s15
        %p578 = scmp.lt.s32.totalorder %s577, 3
        %s579 = scalar_select %p578, %s577, 3
        %s580 = smul.addr %s579, 4
        %s581 = scalar_lea.vmem %s3, %s580
      $region44: #{dqn_conv_forward.5} parent=39 // pred_fallthru
        _
    $region40: #{dqn_conv_forward.5} parent=5 // pred_fallthru
      _
  $region6: #{dqn_conv_forward.5} parent=0 // loop_footer
    %s13 = sadd.s32 1, %s9
  $region7: #{dqn_conv_forward.5} parent=0 // loop_footer_branch
    %8 = sbr.rel target = $region3
  $region8: #{dqn_conv_forward.5} parent=0 // loop_exit
    _

// kernel: dqn_conv_forward.6
$region0: #{dqn_conv_forward.6}
  #allocation0 [shape = 'u32[]', space=smem, size = 0x4, offset = 0x4, fixed_abs, tag = 'smem constant byte address 0x4 - core index']
  #allocation1 [shape = 'u32[144,128]{1,0:T(1,128)}', space=vmem, size = 0x12000, scoped, tag = 'internal scratch']
  %s0 = inlined_call_operand.vmem [shape: bf16[16,640], index: 0, kind: input, shape index: {}]
  %s1 = inlined_call_operand.vmem [shape: bf16[640,64], index: 1, kind: input, shape index: {}]
  %s2 = inlined_call_operand.vmem [shape: f32[1,64], index: 2, kind: input, shape index: {}]
  %s3 = inlined_call_operand.vmem [shape: bf16[16,64], index: 3, kind: output, shape index: {}]
  %s4 = sld [smem:[#allocation0]]
  $region22: #{dqn_conv_forward.6} parent=0
    _
  %s6 = ssub.s32 1, %s4
  %s7 = scalar_select 0, %s6, %s4
  // Predicated region
  $region2: #{dqn_conv_forward.6} parent=0 // pred_check
    _
  $region3: #{dqn_conv_forward.6} parent=0 // pred_check_branch
    %9 = sbr.rel (0) target = $region5
  $region4: #{dqn_conv_forward.6} parent=0 // pred_region
    _
  $region5: #{dqn_conv_forward.6} parent=0 // pred_fallthru
    _
  // Predicated region
  $region6: #{dqn_conv_forward.6} parent=0 // pred_check
    _
  $region7: #{dqn_conv_forward.6} parent=0 // pred_check_branch
    %11 = sbr.rel (0) target = $region9
  $region8: #{dqn_conv_forward.6} parent=0 // pred_region
    _
  $region9: #{dqn_conv_forward.6} parent=0 // pred_fallthru
    _
  // Predicated region
  $region10: #{dqn_conv_forward.6} parent=0 // pred_check
    _
  $region11: #{dqn_conv_forward.6} parent=0 // pred_check_branch
    %13 = sbr.rel (0) target = $region13
  $region12: #{dqn_conv_forward.6} parent=0 // pred_region
    _
  $region13: #{dqn_conv_forward.6} parent=0 // pred_fallthru
    _
  %v15 = vld [vmem:[%s0] sm:$0xff]
  %v16 = vld [vmem:[%s0 + $0x8] sm:$0xff]
  %v17 = vld [vmem:[%s0 + $0x10] sm:$0xf]
  %v18 = vld [vmem:[%s0 + $0x14] sm:$0xff]
  %v19 = vld [vmem:[%s0 + $0x1c] sm:$0xff]
  %v20 = vld [vmem:[%s0 + $0x24] sm:$0xf]
  %v21 = vld [vmem:[%s1] sm:$0xf]
  %v22 = vld [vmem:[%s1 + $0x4] sm:$0xf]
  %v23 = vld [vmem:[%s1 + $0x8] sm:$0xf]
  %v24 = vld [vmem:[%s1 + $0xc] sm:$0xf]
  %v25 = vld [vmem:[%s1 + $0x10] sm:$0xf]
  %v26 = vld [vmem:[%s1 + $0x14] sm:$0xf]
  %v27 = vld [vmem:[%s1 + $0x18] sm:$0xf]
  %v28 = vld [vmem:[%s1 + $0x1c] sm:$0xf]
  %v29 = vld [vmem:[%s1 + $0x20] sm:$0xf]
  %v30 = vld [vmem:[%s1 + $0x24] sm:$0xf]
  %v31 = vld [vmem:[%s1 + $0x28] sm:$0xf]
  %v32 = vld [vmem:[%s1 + $0x2c] sm:$0xf]
  %v33 = vld [vmem:[%s1 + $0x30] sm:$0xf]
  %v34 = vld [vmem:[%s1 + $0x34] sm:$0xf]
  %v35 = vld [vmem:[%s1 + $0x38] sm:$0xf]
  %v36 = vld [vmem:[%s1 + $0x3c] sm:$0xf]
  %v37 = vld [vmem:[%s1 + $0x40] sm:$0xf]
  %v38 = vld [vmem:[%s1 + $0x44] sm:$0xf]
  %v39 = vld [vmem:[%s1 + $0x48] sm:$0xf]
  %v40 = vld [vmem:[%s1 + $0x4c] sm:$0xf]
  %v41 = vld [vmem:[%s1 + $0x50] sm:$0xf]
  %v42 = vld [vmem:[%s1 + $0x54] sm:$0xf]
  %v43 = vld [vmem:[%s1 + $0x58] sm:$0xf]
  %v44 = vld [vmem:[%s1 + $0x5c] sm:$0xf]
  %v45 = vld [vmem:[%s1 + $0x60] sm:$0xf]
  %v46 = vld [vmem:[%s1 + $0x64] sm:$0xf]
  %v47 = vld [vmem:[%s1 + $0x68] sm:$0xf]
  %v48 = vld [vmem:[%s1 + $0x6c] sm:$0xf]
  %v49 = vld [vmem:[%s1 + $0x70] sm:$0xf]
  %v50 = vld [vmem:[%s1 + $0x74] sm:$0xf]
  %v51 = vld [vmem:[%s1 + $0x78] sm:$0xf]
  %v52 = vld [vmem:[%s1 + $0x7c] sm:$0xf]
  %v53 = vld [vmem:[%s1 + $0x80] sm:$0xf]
  %v54 = vld [vmem:[%s1 + $0x84] sm:$0xf]
  %v55 = vld [vmem:[%s1 + $0x88] sm:$0xf]
  %v56 = vld [vmem:[%s1 + $0x8c] sm:$0xf]
  %v57 = vld [vmem:[%s1 + $0x90] sm:$0xf]
  %v58 = vld [vmem:[%s1 + $0x94] sm:$0xf]
  %v59 = vld [vmem:[%s1 + $0x98] sm:$0xf]
  %v60 = vld [vmem:[%s1 + $0x9c] sm:$0xf]
  %v61 = vld [vmem:[%s1 + $0xa0] sm:$0xf]
  %v62 = vld [vmem:[%s1 + $0xa4] sm:$0xf]
  %v63 = vld [vmem:[%s1 + $0xa8] sm:$0xf]
  %v64 = vld [vmem:[%s1 + $0xac] sm:$0xf]
  %v65 = vld [vmem:[%s1 + $0xb0] sm:$0xf]
  %v66 = vld [vmem:[%s1 + $0xb4] sm:$0xf]
  %v67 = vld [vmem:[%s1 + $0xb8] sm:$0xf]
  %v68 = vld [vmem:[%s1 + $0xbc] sm:$0xf]
  %v69 = vld [vmem:[%s1 + $0xc0] sm:$0xf]
  %v70 = vld [vmem:[%s1 + $0xc4] sm:$0xf]
  %v71 = vld [vmem:[%s1 + $0xc8] sm:$0xf]
  %v72 = vld [vmem:[%s1 + $0xcc] sm:$0xf]
  %v73 = vld [vmem:[%s1 + $0xd0] sm:$0xf]
  %v74 = vld [vmem:[%s1 + $0xd4] sm:$0xf]
  %v75 = vld [vmem:[%s1 + $0xd8] sm:$0xf]
  %v76 = vld [vmem:[%s1 + $0xdc] sm:$0xf]
  %v77 = vld [vmem:[%s1 + $0xe0] sm:$0xf]
  %v78 = vld [vmem:[%s1 + $0xe4] sm:$0xf]
  %v79 = vld [vmem:[%s1 + $0xe8] sm:$0xf]
  %v80 = vld [vmem:[%s1 + $0xec] sm:$0xf]
  %v81 = vld [vmem:[%s1 + $0xf0] sm:$0xf]
  %v82 = vld [vmem:[%s1 + $0xf4] sm:$0xf]
  %v83 = vld [vmem:[%s1 + $0xf8] sm:$0xf]
  %v84 = vld [vmem:[%s1 + $0xfc] sm:$0xf]
  %v85 = vld [vmem:[%s1 + $0x100] sm:$0xf]
  %v86 = vld [vmem:[%s1 + $0x104] sm:$0xf]
  %v87 = vld [vmem:[%s1 + $0x108] sm:$0xf]
  %v88 = vld [vmem:[%s1 + $0x10c] sm:$0xf]
  %v89 = vld [vmem:[%s1 + $0x110] sm:$0xf]
  %v90 = vld [vmem:[%s1 + $0x114] sm:$0xf]
  %v91 = vld [vmem:[%s1 + $0x118] sm:$0xf]
  %v92 = vld [vmem:[%s1 + $0x11c] sm:$0xf]
  %v93 = vld [vmem:[%s1 + $0x120] sm:$0xf]
  %v94 = vld [vmem:[%s1 + $0x124] sm:$0xf]
  %v95 = vld [vmem:[%s1 + $0x128] sm:$0xf]
  %v96 = vld [vmem:[%s1 + $0x12c] sm:$0xf]
  %v97 = vld [vmem:[%s1 + $0x130] sm:$0xf]
  %v98 = vld [vmem:[%s1 + $0x134] sm:$0xf]
  %v99 = vld [vmem:[%s1 + $0x138] sm:$0xf]
  %v100 = vld [vmem:[%s1 + $0x13c] sm:$0xf]
  %v101 = vld [vmem:[%s2] sm:$0x1]
  %v103 = vlaneseq
  %v104 = vshrl.u32 %v103, 7
  %v105 = vsub.s32 0, %v104
  %v106 = vrot.slane %v101, %v105
  %v114 = vunpack.c.l.b16 %v15
  %v115 = vunpack.c.h.b16 %v15
  %v116 = vunpack.c.l.b16 %v16
  %v117 = vunpack.c.h.b16 %v16
  %v118 = vunpack.c.l.b16 %v17
  %v119 = vunpack.c.l.b16 %v18
  %v120 = vunpack.c.h.b16 %v18
  %v121 = vunpack.c.l.b16 %v19
  %v122 = vunpack.c.h.b16 %v19
  %v123 = vunpack.c.l.b16 %v20
  %v124 = vpack.c.b16 %v119, %v114
  %v125 = vpack.c.b16 %v120, %v115
  %v126 = vpack.c.b16 %v121, %v116
  %v127 = vpack.c.b16 %v122, %v117
  %v128 = vpack.c.b16 %v123, %v118
  %v214 = vunpack.c.l.b16 %v21
  %v215 = vunpack.c.l.b16 %v22
  %v216 = vunpack.c.l.b16 %v23
  %v217 = vunpack.c.l.b16 %v24
  %v218 = vunpack.c.l.b16 %v25
  %v219 = vunpack.c.l.b16 %v26
  %v220 = vunpack.c.l.b16 %v27
  %v221 = vunpack.c.l.b16 %v28
  %v222 = vunpack.c.l.b16 %v29
  %v223 = vunpack.c.l.b16 %v30
  %v224 = vunpack.c.l.b16 %v31
  %v225 = vunpack.c.l.b16 %v32
  %v226 = vunpack.c.l.b16 %v33
  %v227 = vunpack.c.l.b16 %v34
  %v228 = vunpack.c.l.b16 %v35
  %v229 = vunpack.c.l.b16 %v36
  %v230 = vunpack.c.l.b16 %v37
  %v231 = vunpack.c.l.b16 %v38
  %v232 = vunpack.c.l.b16 %v39
  %v233 = vunpack.c.l.b16 %v40
  %v234 = vunpack.c.l.b16 %v41
  %v235 = vunpack.c.l.b16 %v42
  %v236 = vunpack.c.l.b16 %v43
  %v237 = vunpack.c.l.b16 %v44
  %v238 = vunpack.c.l.b16 %v45
  %v239 = vunpack.c.l.b16 %v46
  %v240 = vunpack.c.l.b16 %v47
  %v241 = vunpack.c.l.b16 %v48
  %v242 = vunpack.c.l.b16 %v49
  %v243 = vunpack.c.l.b16 %v50
  %v244 = vunpack.c.l.b16 %v51
  %v245 = vunpack.c.l.b16 %v52
  %v246 = vunpack.c.l.b16 %v53
  %v247 = vunpack.c.l.b16 %v54
  %v248 = vunpack.c.l.b16 %v55
  %v249 = vunpack.c.l.b16 %v56
  %v250 = vunpack.c.l.b16 %v57
  %v251 = vunpack.c.l.b16 %v58
  %v252 = vunpack.c.l.b16 %v59
  %v253 = vunpack.c.l.b16 %v60
  %v254 = vunpack.c.l.b16 %v61
  %v255 = vunpack.c.l.b16 %v62
  %v256 = vunpack.c.l.b16 %v63
  %v257 = vunpack.c.l.b16 %v64
  %v258 = vunpack.c.l.b16 %v65
  %v259 = vunpack.c.l.b16 %v66
  %v260 = vunpack.c.l.b16 %v67
  %v261 = vunpack.c.l.b16 %v68
  %v262 = vunpack.c.l.b16 %v69
  %v263 = vunpack.c.l.b16 %v70
  %v264 = vunpack.c.l.b16 %v71
  %v265 = vunpack.c.l.b16 %v72
  %v266 = vunpack.c.l.b16 %v73
  %v267 = vunpack.c.l.b16 %v74
  %v268 = vunpack.c.l.b16 %v75
  %v269 = vunpack.c.l.b16 %v76
  %v270 = vunpack.c.l.b16 %v77
  %v271 = vunpack.c.l.b16 %v78
  %v272 = vunpack.c.l.b16 %v79
  %v273 = vunpack.c.l.b16 %v80
  %v274 = vunpack.c.l.b16 %v81
  %v275 = vunpack.c.l.b16 %v82
  %v276 = vunpack.c.l.b16 %v83
  %v277 = vunpack.c.l.b16 %v84
  %v278 = vunpack.c.l.b16 %v85
  %v279 = vunpack.c.l.b16 %v86
  %v280 = vunpack.c.l.b16 %v87
  %v281 = vunpack.c.l.b16 %v88
  %v282 = vunpack.c.l.b16 %v89
  %v283 = vunpack.c.l.b16 %v90
  %v284 = vunpack.c.l.b16 %v91
  %v285 = vunpack.c.l.b16 %v92
  %v286 = vunpack.c.l.b16 %v93
  %v287 = vunpack.c.l.b16 %v94
  %v288 = vunpack.c.l.b16 %v95
  %v289 = vunpack.c.l.b16 %v96
  %v290 = vunpack.c.l.b16 %v97
  %v291 = vunpack.c.l.b16 %v98
  %v292 = vunpack.c.l.b16 %v99
  %v293 = vunpack.c.l.b16 %v100
  %v294 = vpack.c.b16 %v215, %v214
  %v295 = vpack.c.b16 %v217, %v216
  %v296 = vpack.c.b16 %v219, %v218
  %v297 = vpack.c.b16 %v221, %v220
  %v298 = vpack.c.b16 %v223, %v222
  %v299 = vpack.c.b16 %v225, %v224
  %v300 = vpack.c.b16 %v227, %v226
  %v301 = vpack.c.b16 %v229, %v228
  %v302 = vpack.c.b16 %v231, %v230
  %v303 = vpack.c.b16 %v233, %v232
  %v304 = vpack.c.b16 %v235, %v234
  %v305 = vpack.c.b16 %v237, %v236
  %v306 = vpack.c.b16 %v239, %v238
  %v307 = vpack.c.b16 %v241, %v240
  %v308 = vpack.c.b16 %v243, %v242
  %v309 = vpack.c.b16 %v245, %v244
  %v310 = vpack.c.b16 %v247, %v246
  %v311 = vpack.c.b16 %v249, %v248
  %v312 = vpack.c.b16 %v251, %v250
  %v313 = vpack.c.b16 %v253, %v252
  %v314 = vpack.c.b16 %v255, %v254
  %v315 = vpack.c.b16 %v257, %v256
  %v316 = vpack.c.b16 %v259, %v258
  %v317 = vpack.c.b16 %v261, %v260
  %v318 = vpack.c.b16 %v263, %v262
  %v319 = vpack.c.b16 %v265, %v264
  %v320 = vpack.c.b16 %v267, %v266
  %v321 = vpack.c.b16 %v269, %v268
  %v322 = vpack.c.b16 %v271, %v270
  %v323 = vpack.c.b16 %v273, %v272
  %v324 = vpack.c.b16 %v275, %v274
  %v325 = vpack.c.b16 %v277, %v276
  %v326 = vpack.c.b16 %v279, %v278
  %v327 = vpack.c.b16 %v281, %v280
  %v328 = vpack.c.b16 %v283, %v282
  %v329 = vpack.c.b16 %v285, %v284
  %v330 = vpack.c.b16 %v287, %v286
  %v331 = vpack.c.b16 %v289, %v288
  %v332 = vpack.c.b16 %v291, %v290
  %v333 = vpack.c.b16 %v293, %v292
  %374 = vmatprep.subr.bf16.mxu0 0
  %375 = vmatpush1.bf16.msra.mxu0 %v294
  %376 = vmatprep.subr.bf16.mxu0 0
  %377 = vmatpush1.bf16.msra.mxu0 %v295
  %378 = vmatprep.subr.bf16.mxu0 0
  %379 = vmatpush1.bf16.msra.mxu0 %v296
  %380 = vmatprep.subr.bf16.mxu0 0
  %381 = vmatpush1.bf16.msra.mxu0 %v297
  %382 = vmatprep.subr.bf16.mxu0 0
  %383 = vmatpush1.bf16.msra.mxu0 %v298
  %384 = vmatprep.subr.bf16.mxu0 0
  %385 = vmatpush1.bf16.msra.mxu0 %v299
  %386 = vmatprep.subr.bf16.mxu0 0
  %387 = vmatpush1.bf16.msra.mxu0 %v300
  %388 = vmatprep.subr.bf16.mxu0 0
  %389 = vmatpush1.bf16.msra.mxu0 %v301
  %390 = vmatprep.subr.bf16.mxu0 0
  %391 = vmatpush1.bf16.msra.mxu0 %v302
  %392 = vmatprep.subr.bf16.mxu0 0
  %393 = vmatpush1.bf16.msra.mxu0 %v303
  %394 = vmatprep.subr.bf16.mxu0 0
  %395 = vmatpush1.bf16.msra.mxu0 %v304
  %396 = vmatprep.subr.bf16.mxu0 0
  %397 = vmatpush1.bf16.msra.mxu0 %v305
  %398 = vmatprep.subr.bf16.mxu0 0
  %399 = vmatpush1.bf16.msra.mxu0 %v306
  %400 = vmatprep.subr.bf16.mxu0 0
  %401 = vmatpush1.bf16.msra.mxu0 %v307
  %402 = vmatprep.subr.bf16.mxu0 0
  %403 = vmatpush1.bf16.msra.mxu0 %v308
  %404 = vmatprep.subr.bf16.mxu0 0
  %405 = vmatpush1.bf16.msra.mxu0 %v309
  %406 = vmatprep.mubr.bf16.mxu0 %v125
  %407 = vmatmul.mubr.bf16.gmra.mrb[0].mxu0 %v124
  %v408 = vpop.f32.mrb[0].mxu0
  %v409 = vadd.f32 %v106, %v408
  %v410 = vpop.f32.mrb[0].mxu0
  %v411 = vpop.f32.mrb[0].mxu0
  %v412 = vadd.f32 %v106, %v411
  %v413 = vpop.f32.mrb[0].mxu0
  %414 = vdwg.mxu0
  %415 = vmatprep.subr.bf16.mxu0 0
  %416 = vmatpush1.bf16.msra.mxu0 %v310
  %417 = vmatprep.subr.bf16.mxu0 0
  %418 = vmatpush1.bf16.msra.mxu0 %v311
  %419 = vmatprep.subr.bf16.mxu0 0
  %420 = vmatpush1.bf16.msra.mxu0 %v312
  %421 = vmatprep.subr.bf16.mxu0 0
  %422 = vmatpush1.bf16.msra.mxu0 %v313
  %423 = vmatprep.subr.bf16.mxu0 0
  %424 = vmatpush1.bf16.msra.mxu0 %v314
  %425 = vmatprep.subr.bf16.mxu0 0
  %426 = vmatpush1.bf16.msra.mxu0 %v315
  %427 = vmatprep.subr.bf16.mxu0 0
  %428 = vmatpush1.bf16.msra.mxu0 %v316
  %429 = vmatprep.subr.bf16.mxu0 0
  %430 = vmatpush1.bf16.msra.mxu0 %v317
  %431 = vmatprep.subr.bf16.mxu0 0
  %432 = vmatpush1.bf16.msra.mxu0 %v318
  %433 = vmatprep.subr.bf16.mxu0 0
  %434 = vmatpush1.bf16.msra.mxu0 %v319
  %435 = vmatprep.subr.bf16.mxu0 0
  %436 = vmatpush1.bf16.msra.mxu0 %v320
  %437 = vmatprep.subr.bf16.mxu0 0
  %438 = vmatpush1.bf16.msra.mxu0 %v321
  %439 = vmatprep.subr.bf16.mxu0 0
  %440 = vmatpush1.bf16.msra.mxu0 %v322
  %441 = vmatprep.subr.bf16.mxu0 0
  %442 = vmatpush1.bf16.msra.mxu0 %v323
  %443 = vmatprep.subr.bf16.mxu0 0
  %444 = vmatpush1.bf16.msra.mxu0 %v324
  %445 = vmatprep.subr.bf16.mxu0 0
  %446 = vmatpush1.bf16.msra.mxu0 %v325
  %447 = vmatprep.mubr.bf16.mxu0 %v127
  %448 = vmatmul.mubr.bf16.gmra.mrb[0].mxu0 %v126
  %v449 = vpop.f32.mrb[0].mxu0
  %v450 = vadd.f32 %v409, %v449
  %v451 = vpop.f32.mrb[0].mxu0
  %v452 = vpop.f32.mrb[0].mxu0
  %v453 = vadd.f32 %v412, %v452
  %v454 = vpop.f32.mrb[0].mxu0
  %455 = vdwg.mxu0
  %456 = vmatprep.subr.bf16.mxu0 0
  %457 = vmatpush1.bf16.msra.mxu0 %v326
  %458 = vmatprep.subr.bf16.mxu0 0
  %459 = vmatpush1.bf16.msra.mxu0 %v327
  %460 = vmatprep.subr.bf16.mxu0 0
  %461 = vmatpush1.bf16.msra.mxu0 %v328
  %462 = vmatprep.subr.bf16.mxu0 0
  %463 = vmatpush1.bf16.msra.mxu0 %v329
  %464 = vmatprep.subr.bf16.mxu0 0
  %465 = vmatpush1.bf16.msra.mxu0 %v330
  %466 = vmatprep.subr.bf16.mxu0 0
  %467 = vmatpush1.bf16.msra.mxu0 %v331
  %468 = vmatprep.subr.bf16.mxu0 0
  %469 = vmatpush1.bf16.msra.mxu0 %v332
  %470 = vmatprep.subr.bf16.mxu0 0
  %471 = vmatpush1.bf16.msra.mxu0 %v333
  %472 = vmatprep.subr.bf16.mxu0 0
  %473 = vmatpush1.bf16.msra.mxu0 0
  %474 = vmatprep.subr.bf16.mxu0 0
  %475 = vmatpush1.bf16.msra.mxu0 0
  %476 = vmatprep.subr.bf16.mxu0 0
  %477 = vmatpush1.bf16.msra.mxu0 0
  %478 = vmatprep.subr.bf16.mxu0 0
  %479 = vmatpush1.bf16.msra.mxu0 0
  %480 = vmatprep.subr.bf16.mxu0 0
  %481 = vmatpush1.bf16.msra.mxu0 0
  %482 = vmatprep.subr.bf16.mxu0 0
  %483 = vmatpush1.bf16.msra.mxu0 0
  %484 = vmatprep.subr.bf16.mxu0 0
  %485 = vmatpush1.bf16.msra.mxu0 0
  %486 = vmatprep.subr.bf16.mxu0 0
  %487 = vmatpush1.bf16.msra.mxu0 0
  %488 = vmatprep.mubr.bf16.mxu0 0
  %489 = vmatmul.mubr.bf16.gmra.mrb[0].mxu0 %v128
  %v490 = vpop.f32.mrb[0].mxu0
  %v491 = vadd.f32 %v450, %v490
  %v492 = vpop.f32.mrb[0].mxu0
  %v493 = vpop.f32.mrb[0].mxu0
  %v494 = vadd.f32 %v453, %v493
  %v495 = vpop.f32.mrb[0].mxu0
  %496 = vdwg.mxu0
  %v497 = vmax.f32 %v491, 0.0
  %v498 = vmax.f32 %v494, 0.0
  %v499 = vpack.c.bf16 %v498, %v497
  %v501 = vunpack.c.l.b16 %v499
  %v502 = vunpack.c.h.b16 %v499
  %v503 = vpack.c.b16 %v501, %v501
  %v504 = vpack.c.b16 %v502, %v502
  %vm507 = vcmask 519168
  %508 = vst.msk [vmem:[%s3] sm:$0xf] %vm507, %v503
  %509 = vst.msk [vmem:[%s3 + $0x4] sm:$0xf] %vm507, %v504
  // Predicated region
  $region14: #{dqn_conv_forward.6} parent=0 // pred_check
    _
  $region15: #{dqn_conv_forward.6} parent=0 // pred_check_branch
    %511 = sbr.rel (0) target = $region17
  $region16: #{dqn_conv_forward.6} parent=0 // pred_region
    _
  $region17: #{dqn_conv_forward.6} parent=0 // pred_fallthru
    _
  // Predicated region
  $region18: #{dqn_conv_forward.6} parent=0 // pred_check
    _
  $region19: #{dqn_conv_forward.6} parent=0 // pred_check_branch
    %513 = sbr.rel (0) target = $region21
  $region20: #{dqn_conv_forward.6} parent=0 // pred_region
    _
  $region21: #{dqn_conv_forward.6} parent=0 // pred_fallthru
    _

// kernel: dqn_conv_forward.7
$region0: #{dqn_conv_forward.7}
  #allocation0 [shape = 'u32[]', space=smem, size = 0x4, offset = 0x4, fixed_abs, tag = 'smem constant byte address 0x4 - core index']
  #allocation1 [shape = 'u32[144,128]{1,0:T(1,128)}', space=vmem, size = 0x12000, scoped, tag = 'internal scratch']
  %s0 = inlined_call_operand.vmem [shape: bf16[16,64], index: 0, kind: input, shape index: {}]
  %s1 = inlined_call_operand.vmem [shape: bf16[64,512], index: 1, kind: input, shape index: {}]
  %s2 = inlined_call_operand.vmem [shape: f32[1,512], index: 2, kind: input, shape index: {}]
  %s3 = inlined_call_operand.vmem [shape: bf16[512,6], index: 3, kind: input, shape index: {}]
  %s4 = inlined_call_operand.vmem [shape: f32[1,6], index: 4, kind: input, shape index: {}]
  %s5 = inlined_call_operand.vmem [shape: f32[16,6], index: 5, kind: output, shape index: {}]
  %s6 = sld [smem:[#allocation0]]
  $region30: #{dqn_conv_forward.7} parent=0
    _
  %s8 = ssub.s32 1, %s6
  %s9 = scalar_select 0, %s8, %s6
  // Predicated region
  $region2: #{dqn_conv_forward.7} parent=0 // pred_check
    _
  $region3: #{dqn_conv_forward.7} parent=0 // pred_check_branch
    %11 = sbr.rel (0) target = $region5
  $region4: #{dqn_conv_forward.7} parent=0 // pred_region
    _
  $region5: #{dqn_conv_forward.7} parent=0 // pred_fallthru
    _
  // Predicated region
  $region6: #{dqn_conv_forward.7} parent=0 // pred_check
    _
  $region7: #{dqn_conv_forward.7} parent=0 // pred_check_branch
    %13 = sbr.rel (0) target = $region9
  $region8: #{dqn_conv_forward.7} parent=0 // pred_region
    _
  $region9: #{dqn_conv_forward.7} parent=0 // pred_fallthru
    _
  // Predicated region
  $region10: #{dqn_conv_forward.7} parent=0 // pred_check
    _
  $region11: #{dqn_conv_forward.7} parent=0 // pred_check_branch
    %15 = sbr.rel (0) target = $region13
  $region12: #{dqn_conv_forward.7} parent=0 // pred_region
    _
  $region13: #{dqn_conv_forward.7} parent=0 // pred_fallthru
    _
  // Predicated region
  $region14: #{dqn_conv_forward.7} parent=0 // pred_check
    _
  $region15: #{dqn_conv_forward.7} parent=0 // pred_check_branch
    %17 = sbr.rel (0) target = $region17
  $region16: #{dqn_conv_forward.7} parent=0 // pred_region
    _
  $region17: #{dqn_conv_forward.7} parent=0 // pred_fallthru
    _
  // Predicated region
  $region18: #{dqn_conv_forward.7} parent=0 // pred_check
    _
  $region19: #{dqn_conv_forward.7} parent=0 // pred_check_branch
    %19 = sbr.rel (0) target = $region21
  $region20: #{dqn_conv_forward.7} parent=0 // pred_region
    _
  $region21: #{dqn_conv_forward.7} parent=0 // pred_fallthru
    _
  %v21 = vld [vmem:[%s0] sm:$0xf]
  %v22 = vld [vmem:[%s0 + $0x4] sm:$0xf]
  %v23 = vld [vmem:[%s1] sm:$0xff]
  %v24 = vld [vmem:[%s1 + $0x8] sm:$0xff]
  %v25 = vld [vmem:[%s1 + $0x10] sm:$0xff]
  %v26 = vld [vmem:[%s1 + $0x18] sm:$0xff]
  %v27 = vld [vmem:[%s1 + $0x20] sm:$0xff]
  %v28 = vld [vmem:[%s1 + $0x28] sm:$0xff]
  %v29 = vld [vmem:[%s1 + $0x30] sm:$0xff]
  %v30 = vld [vmem:[%s1 + $0x38] sm:$0xff]
  %v31 = vld [vmem:[%s1 + $0x40] sm:$0xff]
  %v32 = vld [vmem:[%s1 + $0x48] sm:$0xff]
  %v33 = vld [vmem:[%s1 + $0x50] sm:$0xff]
  %v34 = vld [vmem:[%s1 + $0x58] sm:$0xff]
  %v35 = vld [vmem:[%s1 + $0x60] sm:$0xff]
  %v36 = vld [vmem:[%s1 + $0x68] sm:$0xff]
  %v37 = vld [vmem:[%s1 + $0x70] sm:$0xff]
  %v38 = vld [vmem:[%s1 + $0x78] sm:$0xff]
  %v39 = vld [vmem:[%s2] sm:$0xf]
  %v41 = vlaneseq
  %v42 = vshrl.u32 %v41, 7
  %v43 = vsub.s32 0, %v42
  %v44 = vrot.slane %v39, %v43
  %v45 = vlaneseq
  %v46 = vshrl.u32 %v45, 7
  %v47 = vsub.s32 1, %v46
  %v48 = vrot.slane %v39, %v47
  %v49 = vlaneseq
  %v50 = vshrl.u32 %v49, 7
  %v51 = vsub.s32 2, %v50
  %v52 = vrot.slane %v39, %v51
  %v53 = vlaneseq
  %v54 = vshrl.u32 %v53, 7
  %v55 = vsub.s32 3, %v54
  %v56 = vrot.slane %v39, %v55
  %v63 = vunpack.c.l.b16 %v21
  %v64 = vunpack.c.l.b16 %v22
  %v65 = vpack.c.b16 %v64, %v63
  %v82 = vunpack.c.l.b16 %v23
  %v83 = vunpack.c.h.b16 %v23
  %v84 = vunpack.c.l.b16 %v24
  %v85 = vunpack.c.h.b16 %v24
  %v86 = vunpack.c.l.b16 %v25
  %v87 = vunpack.c.h.b16 %v25
  %v88 = vunpack.c.l.b16 %v26
  %v89 = vunpack.c.h.b16 %v26
  %v90 = vunpack.c.l.b16 %v27
  %v91 = vunpack.c.h.b16 %v27
  %v92 = vunpack.c.l.b16 %v28
  %v93 = vunpack.c.h.b16 %v28
  %v94 = vunpack.c.l.b16 %v29
  %v95 = vunpack.c.h.b16 %v29
  %v96 = vunpack.c.l.b16 %v30
  %v97 = vunpack.c.h.b16 %v30
  %v98 = vunpack.c.l.b16 %v31
  %v99 = vunpack.c.h.b16 %v31
  %v100 = vunpack.c.l.b16 %v32
  %v101 = vunpack.c.h.b16 %v32
  %v102 = vunpack.c.l.b16 %v33
  %v103 = vunpack.c.h.b16 %v33
  %v104 = vunpack.c.l.b16 %v34
  %v105 = vunpack.c.h.b16 %v34
  %v106 = vunpack.c.l.b16 %v35
  %v107 = vunpack.c.h.b16 %v35
  %v108 = vunpack.c.l.b16 %v36
  %v109 = vunpack.c.h.b16 %v36
  %v110 = vunpack.c.l.b16 %v37
  %v111 = vunpack.c.h.b16 %v37
  %v112 = vunpack.c.l.b16 %v38
  %v113 = vunpack.c.h.b16 %v38
  %v114 = vpack.c.b16 %v86, %v82
  %v115 = vpack.c.b16 %v87, %v83
  %v116 = vpack.c.b16 %v88, %v84
  %v117 = vpack.c.b16 %v89, %v85
  %v118 = vpack.c.b16 %v94, %v90
  %v119 = vpack.c.b16 %v95, %v91
  %v120 = vpack.c.b16 %v96, %v92
  %v121 = vpack.c.b16 %v97, %v93
  %v122 = vpack.c.b16 %v102, %v98
  %v123 = vpack.c.b16 %v103, %v99
  %v124 = vpack.c.b16 %v104, %v100
  %v125 = vpack.c.b16 %v105, %v101
  %v126 = vpack.c.b16 %v110, %v106
  %v127 = vpack.c.b16 %v111, %v107
  %v128 = vpack.c.b16 %v112, %v108
  %v129 = vpack.c.b16 %v113, %v109
  %vm146 = vcmask 523264
  %v148 = vsel %vm146, %v65, 0
  %150 = vmatprep.subr.bf16.mxu0 %v115
  %151 = vmatpush1.bf16.msra.mxu0 %v114
  %152 = vmatprep.subr.bf16.mxu0 %v119
  %153 = vmatpush1.bf16.msra.mxu0 %v118
  %154 = vmatprep.subr.bf16.mxu0 %v123
  %155 = vmatpush1.bf16.msra.mxu0 %v122
  %156 = vmatprep.subr.bf16.mxu0 %v127
  %157 = vmatpush1.bf16.msra.mxu0 %v126
  %158 = vmatprep.subr.bf16.mxu0 0
  %159 = vmatpush1.bf16.msra.mxu0 0
  %160 = vmatprep.subr.bf16.mxu0 0
  %161 = vmatpush1.bf16.msra.mxu0 0
  %162 = vmatprep.subr.bf16.mxu0 0
  %163 = vmatpush1.bf16.msra.mxu0 0
  %164 = vmatprep.subr.bf16.mxu0 0
  %165 = vmatpush1.bf16.msra.mxu0 0
  %166 = vmatprep.subr.bf16.mxu0 0
  %167 = vmatpush1.bf16.msra.mxu0 0
  %168 = vmatprep.subr.bf16.mxu0 0
  %169 = vmatpush1.bf16.msra.mxu0 0
  %170 = vmatprep.subr.bf16.mxu0 0
  %171 = vmatpush1.bf16.msra.mxu0 0
  %172 = vmatprep.subr.bf16.mxu0 0
  %173 = vmatpush1.bf16.msra.mxu0 0
  %174 = vmatprep.subr.bf16.mxu0 0
  %175 = vmatpush1.bf16.msra.mxu0 0
  %176 = vmatprep.subr.bf16.mxu0 0
  %177 = vmatpush1.bf16.msra.mxu0 0
  %178 = vmatprep.subr.bf16.mxu0 0
  %179 = vmatpush1.bf16.msra.mxu0 0
  %180 = vmatprep.subr.bf16.mxu0 0
  %181 = vmatpush1.bf16.msra.mxu0 0
  %182 = vmatprep.mubr.bf16.mxu0 0
  %183 = vmatmul.mubr.bf16.gmra.mrb[0].mxu0 %v148
  %v184 = vpop.f32.mrb[0].mxu0
  %v185 = vadd.f32 %v44, %v184
  %v186 = vpop.f32.mrb[0].mxu0
  %v187 = vadd.f32 %v48, %v186
  %v188 = vpop.f32.mrb[0].mxu0
  %v189 = vadd.f32 %v44, %v188
  %v190 = vpop.f32.mrb[0].mxu0
  %v191 = vadd.f32 %v48, %v190
  %192 = vdwg.mxu0
  %193 = vmatprep.subr.bf16.mxu0 %v117
  %194 = vmatpush1.bf16.msra.mxu0 %v116
  %195 = vmatprep.subr.bf16.mxu0 %v121
  %196 = vmatpush1.bf16.msra.mxu0 %v120
  %197 = vmatprep.subr.bf16.mxu0 %v125
  %198 = vmatpush1.bf16.msra.mxu0 %v124
  %199 = vmatprep.subr.bf16.mxu0 %v129
  %200 = vmatpush1.bf16.msra.mxu0 %v128
  %201 = vmatprep.subr.bf16.mxu0 0
  %202 = vmatpush1.bf16.msra.mxu0 0
  %203 = vmatprep.subr.bf16.mxu0 0
  %204 = vmatpush1.bf16.msra.mxu0 0
  %205 = vmatprep.subr.bf16.mxu0 0
  %206 = vmatpush1.bf16.msra.mxu0 0
  %207 = vmatprep.subr.bf16.mxu0 0
  %208 = vmatpush1.bf16.msra.mxu0 0
  %209 = vmatprep.subr.bf16.mxu0 0
  %210 = vmatpush1.bf16.msra.mxu0 0
  %211 = vmatprep.subr.bf16.mxu0 0
  %212 = vmatpush1.bf16.msra.mxu0 0
  %213 = vmatprep.subr.bf16.mxu0 0
  %214 = vmatpush1.bf16.msra.mxu0 0
  %215 = vmatprep.subr.bf16.mxu0 0
  %216 = vmatpush1.bf16.msra.mxu0 0
  %217 = vmatprep.subr.bf16.mxu0 0
  %218 = vmatpush1.bf16.msra.mxu0 0
  %219 = vmatprep.subr.bf16.mxu0 0
  %220 = vmatpush1.bf16.msra.mxu0 0
  %221 = vmatprep.subr.bf16.mxu0 0
  %222 = vmatpush1.bf16.msra.mxu0 0
  %223 = vmatprep.subr.bf16.mxu0 0
  %224 = vmatpush1.bf16.msra.mxu0 0
  %225 = vmatprep.mubr.bf16.mxu0 0
  %226 = vmatmul.mubr.bf16.gmra.mrb[0].mxu0 %v148
  %v227 = vpop.f32.mrb[0].mxu0
  %v228 = vadd.f32 %v52, %v227
  %v229 = vpop.f32.mrb[0].mxu0
  %v230 = vadd.f32 %v56, %v229
  %v231 = vpop.f32.mrb[0].mxu0
  %v232 = vadd.f32 %v52, %v231
  %v233 = vpop.f32.mrb[0].mxu0
  %v234 = vadd.f32 %v56, %v233
  %235 = vdwg.mxu0
  %v236 = vmax.f32 %v185, 0.0
  %v237 = vmax.f32 %v187, 0.0
  %v238 = vmax.f32 %v228, 0.0
  %v239 = vmax.f32 %v230, 0.0
  %v240 = vmax.f32 %v189, 0.0
  %v241 = vmax.f32 %v191, 0.0
  %v242 = vmax.f32 %v232, 0.0
  %v243 = vmax.f32 %v234, 0.0
  %v244 = vpack.c.bf16 %v240, %v236
  %v245 = vpack.c.bf16 %v241, %v237
  %v246 = vpack.c.bf16 %v242, %v238
  %v247 = vpack.c.bf16 %v243, %v239
  %v248 = vld [vmem:[%s3] sm:$0xf]
  %v249 = vld [vmem:[%s3 + $0x4] sm:$0xf]
  %v250 = vld [vmem:[%s3 + $0x8] sm:$0xf]
  %v251 = vld [vmem:[%s3 + $0xc] sm:$0xf]
  %v252 = vld [vmem:[%s3 + $0x10] sm:$0xf]
  %v253 = vld [vmem:[%s3 + $0x14] sm:$0xf]
  %v254 = vld [vmem:[%s3 + $0x18] sm:$0xf]
  %v255 = vld [vmem:[%s3 + $0x1c] sm:$0xf]
  %v256 = vld [vmem:[%s3 + $0x20] sm:$0xf]
  %v257 = vld [vmem:[%s3 + $0x24] sm:$0xf]
  %v258 = vld [vmem:[%s3 + $0x28] sm:$0xf]
  %v259 = vld [vmem:[%s3 + $0x2c] sm:$0xf]
  %v260 = vld [vmem:[%s3 + $0x30] sm:$0xf]
  %v261 = vld [vmem:[%s3 + $0x34] sm:$0xf]
  %v262 = vld [vmem:[%s3 + $0x38] sm:$0xf]
  %v263 = vld [vmem:[%s3 + $0x3c] sm:$0xf]
  %v264 = vld [vmem:[%s3 + $0x40] sm:$0xf]
  %v265 = vld [vmem:[%s3 + $0x44] sm:$0xf]
  %v266 = vld [vmem:[%s3 + $0x48] sm:$0xf]
  %v267 = vld [vmem:[%s3 + $0x4c] sm:$0xf]
  %v268 = vld [vmem:[%s3 + $0x50] sm:$0xf]
  %v269 = vld [vmem:[%s3 + $0x54] sm:$0xf]
  %v270 = vld [vmem:[%s3 + $0x58] sm:$0xf]
  %v271 = vld [vmem:[%s3 + $0x5c] sm:$0xf]
  %v272 = vld [vmem:[%s3 + $0x60] sm:$0xf]
  %v273 = vld [vmem:[%s3 + $0x64] sm:$0xf]
  %v274 = vld [vmem:[%s3 + $0x68] sm:$0xf]
  %v275 = vld [vmem:[%s3 + $0x6c] sm:$0xf]
  %v276 = vld [vmem:[%s3 + $0x70] sm:$0xf]
  %v277 = vld [vmem:[%s3 + $0x74] sm:$0xf]
  %v278 = vld [vmem:[%s3 + $0x78] sm:$0xf]
  %v279 = vld [vmem:[%s3 + $0x7c] sm:$0xf]
  %v280 = vld [vmem:[%s3 + $0x80] sm:$0xf]
  %v281 = vld [vmem:[%s3 + $0x84] sm:$0xf]
  %v282 = vld [vmem:[%s3 + $0x88] sm:$0xf]
  %v283 = vld [vmem:[%s3 + $0x8c] sm:$0xf]
  %v284 = vld [vmem:[%s3 + $0x90] sm:$0xf]
  %v285 = vld [vmem:[%s3 + $0x94] sm:$0xf]
  %v286 = vld [vmem:[%s3 + $0x98] sm:$0xf]
  %v287 = vld [vmem:[%s3 + $0x9c] sm:$0xf]
  %v288 = vld [vmem:[%s3 + $0xa0] sm:$0xf]
  %v289 = vld [vmem:[%s3 + $0xa4] sm:$0xf]
  %v290 = vld [vmem:[%s3 + $0xa8] sm:$0xf]
  %v291 = vld [vmem:[%s3 + $0xac] sm:$0xf]
  %v292 = vld [vmem:[%s3 + $0xb0] sm:$0xf]
  %v293 = vld [vmem:[%s3 + $0xb4] sm:$0xf]
  %v294 = vld [vmem:[%s3 + $0xb8] sm:$0xf]
  %v295 = vld [vmem:[%s3 + $0xbc] sm:$0xf]
  %v296 = vld [vmem:[%s3 + $0xc0] sm:$0xf]
  %v297 = vld [vmem:[%s3 + $0xc4] sm:$0xf]
  %v298 = vld [vmem:[%s3 + $0xc8] sm:$0xf]
  %v299 = vld [vmem:[%s3 + $0xcc] sm:$0xf]
  %v300 = vld [vmem:[%s3 + $0xd0] sm:$0xf]
  %v301 = vld [vmem:[%s3 + $0xd4] sm:$0xf]
  %v302 = vld [vmem:[%s3 + $0xd8] sm:$0xf]
  %v303 = vld [vmem:[%s3 + $0xdc] sm:$0xf]
  %v304 = vld [vmem:[%s3 + $0xe0] sm:$0xf]
  %v305 = vld [vmem:[%s3 + $0xe4] sm:$0xf]
  %v306 = vld [vmem:[%s3 + $0xe8] sm:$0xf]
  %v307 = vld [vmem:[%s3 + $0xec] sm:$0xf]
  %v308 = vld [vmem:[%s3 + $0xf0] sm:$0xf]
  %v309 = vld [vmem:[%s3 + $0xf4] sm:$0xf]
  %v310 = vld [vmem:[%s3 + $0xf8] sm:$0xf]
  %v311 = vld [vmem:[%s3 + $0xfc] sm:$0xf]
  %v312 = vld [vmem:[%s4] sm:$0x1]
  %v314 = vlaneseq
  %v315 = vshrl.u32 %v314, 7
  %v316 = vsub.s32 0, %v315
  %v317 = vrot.slane %v312, %v316
  %v383 = vunpack.c.l.b16 %v248
  %v384 = vunpack.c.l.b16 %v249
  %v385 = vunpack.c.l.b16 %v250
  %v386 = vunpack.c.l.b16 %v251
  %v387 = vunpack.c.l.b16 %v252
  %v388 = vunpack.c.l.b16 %v253
  %v389 = vunpack.c.l.b16 %v254
  %v390 = vunpack.c.l.b16 %v255
  %v391 = vunpack.c.l.b16 %v256
  %v392 = vunpack.c.l.b16 %v257
  %v393 = vunpack.c.l.b16 %v258
  %v394 = vunpack.c.l.b16 %v259
  %v395 = vunpack.c.l.b16 %v260
  %v396 = vunpack.c.l.b16 %v261
  %v397 = vunpack.c.l.b16 %v262
  %v398 = vunpack.c.l.b16 %v263
  %v399 = vunpack.c.l.b16 %v264
  %v400 = vunpack.c.l.b16 %v265
  %v401 = vunpack.c.l.b16 %v266
  %v402 = vunpack.c.l.b16 %v267
  %v403 = vunpack.c.l.b16 %v268
  %v404 = vunpack.c.l.b16 %v269
  %v405 = vunpack.c.l.b16 %v270
  %v406 = vunpack.c.l.b16 %v271
  %v407 = vunpack.c.l.b16 %v272
  %v408 = vunpack.c.l.b16 %v273
  %v409 = vunpack.c.l.b16 %v274
  %v410 = vunpack.c.l.b16 %v275
  %v411 = vunpack.c.l.b16 %v276
  %v412 = vunpack.c.l.b16 %v277
  %v413 = vunpack.c.l.b16 %v278
  %v414 = vunpack.c.l.b16 %v279
  %v415 = vunpack.c.l.b16 %v280
  %v416 = vunpack.c.l.b16 %v281
  %v417 = vunpack.c.l.b16 %v282
  %v418 = vunpack.c.l.b16 %v283
  %v419 = vunpack.c.l.b16 %v284
  %v420 = vunpack.c.l.b16 %v285
  %v421 = vunpack.c.l.b16 %v286
  %v422 = vunpack.c.l.b16 %v287
  %v423 = vunpack.c.l.b16 %v288
  %v424 = vunpack.c.l.b16 %v289
  %v425 = vunpack.c.l.b16 %v290
  %v426 = vunpack.c.l.b16 %v291
  %v427 = vunpack.c.l.b16 %v292
  %v428 = vunpack.c.l.b16 %v293
  %v429 = vunpack.c.l.b16 %v294
  %v430 = vunpack.c.l.b16 %v295
  %v431 = vunpack.c.l.b16 %v296
  %v432 = vunpack.c.l.b16 %v297
  %v433 = vunpack.c.l.b16 %v298
  %v434 = vunpack.c.l.b16 %v299
  %v435 = vunpack.c.l.b16 %v300
  %v436 = vunpack.c.l.b16 %v301
  %v437 = vunpack.c.l.b16 %v302
  %v438 = vunpack.c.l.b16 %v303
  %v439 = vunpack.c.l.b16 %v304
  %v440 = vunpack.c.l.b16 %v305
  %v441 = vunpack.c.l.b16 %v306
  %v442 = vunpack.c.l.b16 %v307
  %v443 = vunpack.c.l.b16 %v308
  %v444 = vunpack.c.l.b16 %v309
  %v445 = vunpack.c.l.b16 %v310
  %v446 = vunpack.c.l.b16 %v311
  %v447 = vpack.c.b16 %v384, %v383
  %v448 = vpack.c.b16 %v386, %v385
  %v449 = vpack.c.b16 %v388, %v387
  %v450 = vpack.c.b16 %v390, %v389
  %v451 = vpack.c.b16 %v392, %v391
  %v452 = vpack.c.b16 %v394, %v393
  %v453 = vpack.c.b16 %v396, %v395
  %v454 = vpack.c.b16 %v398, %v397
  %v455 = vpack.c.b16 %v400, %v399
  %v456 = vpack.c.b16 %v402, %v401
  %v457 = vpack.c.b16 %v404, %v403
  %v458 = vpack.c.b16 %v406, %v405
  %v459 = vpack.c.b16 %v408, %v407
  %v460 = vpack.c.b16 %v410, %v409
  %v461 = vpack.c.b16 %v412, %v411
  %v462 = vpack.c.b16 %v414, %v413
  %v463 = vpack.c.b16 %v416, %v415
  %v464 = vpack.c.b16 %v418, %v417
  %v465 = vpack.c.b16 %v420, %v419
  %v466 = vpack.c.b16 %v422, %v421
  %v467 = vpack.c.b16 %v424, %v423
  %v468 = vpack.c.b16 %v426, %v425
  %v469 = vpack.c.b16 %v428, %v427
  %v470 = vpack.c.b16 %v430, %v429
  %v471 = vpack.c.b16 %v432, %v431
  %v472 = vpack.c.b16 %v434, %v433
  %v473 = vpack.c.b16 %v436, %v435
  %v474 = vpack.c.b16 %v438, %v437
  %v475 = vpack.c.b16 %v440, %v439
  %v476 = vpack.c.b16 %v442, %v441
  %v477 = vpack.c.b16 %v444, %v443
  %v478 = vpack.c.b16 %v446, %v445
  %511 = vmatprep.subr.bf16.mxu0 0
  %512 = vmatpush1.bf16.msra.mxu0 %v447
  %513 = vmatprep.subr.bf16.mxu0 0
  %514 = vmatpush1.bf16.msra.mxu0 %v448
  %515 = vmatprep.subr.bf16.mxu0 0
  %516 = vmatpush1.bf16.msra.mxu0 %v449
  %517 = vmatprep.subr.bf16.mxu0 0
  %518 = vmatpush1.bf16.msra.mxu0 %v450
  %519 = vmatprep.subr.bf16.mxu0 0
  %520 = vmatpush1.bf16.msra.mxu0 %v451
  %521 = vmatprep.subr.bf16.mxu0 0
  %522 = vmatpush1.bf16.msra.mxu0 %v452
  %523 = vmatprep.subr.bf16.mxu0 0
  %524 = vmatpush1.bf16.msra.mxu0 %v453
  %525 = vmatprep.subr.bf16.mxu0 0
  %526 = vmatpush1.bf16.msra.mxu0 %v454
  %527 = vmatprep.subr.bf16.mxu0 0
  %528 = vmatpush1.bf16.msra.mxu0 %v455
  %529 = vmatprep.subr.bf16.mxu0 0
  %530 = vmatpush1.bf16.msra.mxu0 %v456
  %531 = vmatprep.subr.bf16.mxu0 0
  %532 = vmatpush1.bf16.msra.mxu0 %v457
  %533 = vmatprep.subr.bf16.mxu0 0
  %534 = vmatpush1.bf16.msra.mxu0 %v458
  %535 = vmatprep.subr.bf16.mxu0 0
  %536 = vmatpush1.bf16.msra.mxu0 %v459
  %537 = vmatprep.subr.bf16.mxu0 0
  %538 = vmatpush1.bf16.msra.mxu0 %v460
  %539 = vmatprep.subr.bf16.mxu0 0
  %540 = vmatpush1.bf16.msra.mxu0 %v461
  %541 = vmatprep.subr.bf16.mxu0 0
  %542 = vmatpush1.bf16.msra.mxu0 %v462
  %543 = vmatprep.mubr.bf16.mxu0 %v245
  %544 = vmatmul.mubr.bf16.gmra.mrb[0].mxu0 %v244
  %v545 = vpop.f32.mrb[0].mxu0
  %v546 = vadd.f32 %v317, %v545
  %v547 = vpop.f32.mrb[0].mxu0
  %v548 = vpop.f32.mrb[0].mxu0
  %v549 = vadd.f32 %v317, %v548
  %v550 = vpop.f32.mrb[0].mxu0
  %551 = vdwg.mxu0
  %552 = vmatprep.subr.bf16.mxu0 0
  %553 = vmatpush1.bf16.msra.mxu0 %v463
  %554 = vmatprep.subr.bf16.mxu0 0
  %555 = vmatpush1.bf16.msra.mxu0 %v464
  %556 = vmatprep.subr.bf16.mxu0 0
  %557 = vmatpush1.bf16.msra.mxu0 %v465
  %558 = vmatprep.subr.bf16.mxu0 0
  %559 = vmatpush1.bf16.msra.mxu0 %v466
  %560 = vmatprep.subr.bf16.mxu0 0
  %561 = vmatpush1.bf16.msra.mxu0 %v467
  %562 = vmatprep.subr.bf16.mxu0 0
  %563 = vmatpush1.bf16.msra.mxu0 %v468
  %564 = vmatprep.subr.bf16.mxu0 0
  %565 = vmatpush1.bf16.msra.mxu0 %v469
  %566 = vmatprep.subr.bf16.mxu0 0
  %567 = vmatpush1.bf16.msra.mxu0 %v470
  %568 = vmatprep.subr.bf16.mxu0 0
  %569 = vmatpush1.bf16.msra.mxu0 %v471
  %570 = vmatprep.subr.bf16.mxu0 0
  %571 = vmatpush1.bf16.msra.mxu0 %v472
  %572 = vmatprep.subr.bf16.mxu0 0
  %573 = vmatpush1.bf16.msra.mxu0 %v473
  %574 = vmatprep.subr.bf16.mxu0 0
  %575 = vmatpush1.bf16.msra.mxu0 %v474
  %576 = vmatprep.subr.bf16.mxu0 0
  %577 = vmatpush1.bf16.msra.mxu0 %v475
  %578 = vmatprep.subr.bf16.mxu0 0
  %579 = vmatpush1.bf16.msra.mxu0 %v476
  %580 = vmatprep.subr.bf16.mxu0 0
  %581 = vmatpush1.bf16.msra.mxu0 %v477
  %582 = vmatprep.subr.bf16.mxu0 0
  %583 = vmatpush1.bf16.msra.mxu0 %v478
  %584 = vmatprep.mubr.bf16.mxu0 %v247
  %585 = vmatmul.mubr.bf16.gmra.mrb[0].mxu0 %v246
  %v586 = vpop.f32.mrb[0].mxu0
  %v587 = vadd.f32 %v546, %v586
  %v588 = vpop.f32.mrb[0].mxu0
  %v589 = vpop.f32.mrb[0].mxu0
  %v590 = vadd.f32 %v549, %v589
  %v591 = vpop.f32.mrb[0].mxu0
  %592 = vdwg.mxu0
  %vm593 = vcmask 48128
  %594 = vst.msk [vmem:[%s5] sm:$0xff] %vm593, %v587
  %595 = vst.msk [vmem:[%s5 + $0x8] sm:$0xff] %vm593, %v590
  // Predicated region
  $region22: #{dqn_conv_forward.7} parent=0 // pred_check
    _
  $region23: #{dqn_conv_forward.7} parent=0 // pred_check_branch
    %597 = sbr.rel (0) target = $region25
  $region24: #{dqn_conv_forward.7} parent=0 // pred_region
    _
  $region25: #{dqn_conv_forward.7} parent=0 // pred_fallthru
    _
  // Predicated region
  $region26: #{dqn_conv_forward.7} parent=0 // pred_check
    _
  $region27: #{dqn_conv_forward.7} parent=0 // pred_check_branch
    %599 = sbr.rel (0) target = $region29
  $region28: #{dqn_conv_forward.7} parent=0 // pred_region
    _
  $region29: #{dqn_conv_forward.7} parent=0 // pred_fallthru
    _

</llo_original>
